<compile_context>
chip_gen: v7x
topology: tpu7x:2x2x1
jax: 0.10.0
libtpu: 0.0.40
codegen_flags: <defaults>
</compile_context>

<pallas_src>
import functools
import numpy as np
import jax
import jax.numpy as jnp
from jax.experimental import pallas as pl
from jax.experimental.pallas import tpu as pltpu

# ---- model hyper-parameters (small, consistent with the module) ----
D_MODEL = 32
NHEAD = 4
HEAD_DIM = D_MODEL // NHEAD
DIM_FF = 64
EPS = 1e-5

T_TGT = 8     # target sequence length
S_MEM = 8     # memory sequence length
BATCH = 2

BIAS_LANES = 128  # each packed (1, N<=128) bias/gamma/beta vector occupies one lane-row

# Row indices inside the packed bias slab.
(_B_SA_QKV, _B_SA_O, _B_CA_Q, _B_CA_KV, _B_CA_O,
 _B_FF1, _B_FF2, _B_G1, _B_B1, _B_G2, _B_B2, _B_G3, _B_B3) = range(13)
_BIAS_ROWS = 16  # padded to a sublane multiple


# ============================================================================
# Single fused kernel: whole decoder layer, one program, everything in VMEM.
#   x_ref    : (T*B, D)   target rows, row index = t*B + b  (seq-first row-major flatten)
#   mem_ref  : (S*B, D)   memory rows, row index = s*B + b
#   w_ref    : (D, 10*D)  [sa_wqkv(3D) | sa_wo(D) | ca_wq(D) | ca_wkv(2D) | ca_wo(D) | ff_w1(F)]
#   ffw2_ref : (F, D)
#   bias_ref : (16, 128)  13 bias/gamma/beta rows (see _B_* indices), zero padded
# ============================================================================
def _decoder_layer_kernel(x_ref, mem_ref, w_ref, ffw2_ref, bias_ref, o_ref,
                          *, batch, nhead, head_dim):
    f32 = jnp.float32
    x = x_ref[...].astype(f32)        # (T*B, D)
    mem = mem_ref[...].astype(f32)    # (S*B, D)
    w = w_ref[...].astype(f32)        # (D, 10*D)
    ffw2 = ffw2_ref[...].astype(f32)  # (F, D)
    bias = bias_ref[...].astype(f32)  # (16, 128)

    d = x.shape[-1]
    scale = 1.0 / float(head_dim) ** 0.5   # trace-time constant

    # ---- static slices out of the packed weight slab ----
    sa_wqkv = w[:, 0:3 * d]
    sa_wo   = w[:, 3 * d:4 * d]
    ca_wq   = w[:, 4 * d:5 * d]
    ca_wkv  = w[:, 5 * d:7 * d]
    ca_wo   = w[:, 7 * d:8 * d]
    ff_w1   = w[:, 8 * d:]

    def brow(r, n):
        # (1, n) bias vector from packed slab row r (lane offset 0 -> aligned sub-slice).
        return bias[r:r + 1, 0:n]

    def layernorm(s, g, b):
        mu = jnp.mean(s, axis=-1, keepdims=True)
        c = s - mu
        var = jnp.mean(c * c, axis=-1, keepdims=True)
        return c * jax.lax.rsqrt(var + EPS) * g + b

    def batch_mask(rows, cols):
        # Additive mask: 0 where (row % batch) == (col % batch), else -1e30.
        # Correct ONLY because the wrapper flattens (seq, batch) row-major as t*B + b.
        rb = jax.lax.broadcasted_iota(jnp.int32, (rows, cols), 0) % batch
        cb = jax.lax.broadcasted_iota(jnp.int32, (rows, cols), 1) % batch
        return jnp.where(rb == cb, f32(0.0), f32(-1e30))

    n_tgt, n_mem = x.shape[0], mem.shape[0]
    self_mask = batch_mask(n_tgt, n_tgt)
    cross_mask = self_mask if n_mem == n_tgt else batch_mask(n_tgt, n_mem)

    def attention(q, k, v, wo, bo, amask):
        # Per-head static loop for scores/softmax/PV, then ONE fused output projection:
        # concat head outputs along lanes and hit the full (D, D) wo in a single matmul.
        head_outs = []
        for h in range(nhead):
            sl = slice(h * head_dim, (h + 1) * head_dim)
            qh, kh, vh = q[:, sl], k[:, sl], v[:, sl]
            s = jax.lax.dot_general(qh, kh, (((1,), (1,)), ((), ())),
                                    preferred_element_type=f32) * scale + amask
            s = s - jnp.max(s, axis=-1, keepdims=True)
            p = jnp.exp(s)
            p = p / jnp.sum(p, axis=-1, keepdims=True)        # exact softmax denominator
            head_outs.append(jnp.dot(p, vh, preferred_element_type=f32))   # (Rq, dh)
        concat = jnp.concatenate(head_outs, axis=-1)                         # (Rq, D)
        return jnp.dot(concat, wo, preferred_element_type=f32) + bo

    # ---------------- self attention (fused QKV projection) ----------------
    qkv = jnp.dot(x, sa_wqkv, preferred_element_type=f32) + brow(_B_SA_QKV, 3 * d)
    sa = attention(qkv[:, :d], qkv[:, d:2 * d], qkv[:, 2 * d:],
                   sa_wo, brow(_B_SA_O, d), self_mask)
    x = layernorm(x + sa, brow(_B_G1, d), brow(_B_B1, d))

    # ---------------- cross attention (fused KV projection) ----------------
    q = jnp.dot(x, ca_wq, preferred_element_type=f32) + brow(_B_CA_Q, d)
    kv = jnp.dot(mem, ca_wkv, preferred_element_type=f32) + brow(_B_CA_KV, 2 * d)
    ca = attention(q, kv[:, :d], kv[:, d:], ca_wo, brow(_B_CA_O, d), cross_mask)
    x = layernorm(x + ca, brow(_B_G2, d), brow(_B_B2, d))

    # ---------------- feed-forward (linear -> relu -> linear) --------------
    h1 = jnp.dot(x, ff_w1, preferred_element_type=f32) + brow(_B_FF1, DIM_FF)
    h1 = jnp.maximum(h1, 0.0)
    ff = jnp.dot(h1, ffw2, preferred_element_type=f32) + brow(_B_FF2, d)
    x = layernorm(x + ff, brow(_B_G3, d), brow(_B_B3, d))

    o_ref[...] = x.astype(o_ref.dtype)


# --------------------------- operand packing -------------------------------
def _pack_params(p):
    """Pack all D-row weights into one lane-concatenated slab and all (1,N) vectors into
    one (16,128) bias slab (one 128-lane row per vector).  Wrapper-side, fused by XLA."""
    w_slab = jnp.concatenate([p["sa_wqkv"], p["sa_wo"], p["ca_wq"],
                              p["ca_wkv"], p["ca_wo"], p["ff_w1"]], axis=1)   # (D, 10*D)
    vecs = [p["sa_bqkv"], p["sa_bo"], p["ca_bq"], p["ca_bkv"], p["ca_bo"],
            p["ff_b1"], p["ff_b2"],
            p["g1"], p["b1"], p["g2"], p["b2"], p["g3"], p["b3"]]
    rows = [jnp.pad(v.reshape(1, -1).astype(jnp.float32),
                    ((0, 0), (0, BIAS_LANES - v.size))) for v in vecs]
    bias_slab = jnp.concatenate(rows, axis=0)                                  # (13, 128)
    bias_slab = jnp.pad(bias_slab, ((0, _BIAS_ROWS - bias_slab.shape[0]), (0, 0)))
    return w_slab, bias_slab


def decoder_layer_forward(tgt, memory, p):
    """tgt: (T, B, D), memory: (S, B, D) -- PyTorch (seq, batch, feature) convention."""
    T, B, D = tgt.shape
    S = memory.shape[0]
    # INVARIANT: the kernel's batch-match mask assumes row index = t*B + b, i.e. a
    # row-major flatten of the (seq, batch) leading dims.  Keep these reshapes and
    # batch_mask() in sync.
    x2 = tgt.reshape(T * B, D)
    m2 = memory.reshape(S * B, D)
    w_slab, bias_slab = _pack_params(p)

    kernel = functools.partial(_decoder_layer_kernel,
                               batch=B, nhead=NHEAD, head_dim=HEAD_DIM)
    out2 = pl.pallas_call(
        kernel,
        # No grid: single program; all 5 inputs get default full-array VMEM blocks.
        out_shape=jax.ShapeDtypeStruct((T * B, D), tgt.dtype),
    )(x2, m2, w_slab, p["ff_w2"], bias_slab)
    return out2.reshape(T, B, D)


# ------------------- pure-JAX reference for verification -------------------
def _ref_ln(s, g, b):
    mu = jnp.mean(s, axis=-1, keepdims=True)
    var = jnp.mean(jnp.square(s - mu), axis=-1, keepdims=True)
    return (s - mu) * jax.lax.rsqrt(var + EPS) * g + b


def _ref_mha(xq, xkv, wq, bq, wk, bk, wv, bv, wo, bo):
    q = xq @ wq + bq
    k = xkv @ wk + bk
    v = xkv @ wv + bv
    T, B, D = q.shape
    S = k.shape[0]
    q = q.reshape(T, B, NHEAD, HEAD_DIM)
    k = k.reshape(S, B, NHEAD, HEAD_DIM)
    v = v.reshape(S, B, NHEAD, HEAD_DIM)
    scores = jnp.einsum("tbhd,sbhd->bhts", q, k) / jnp.sqrt(jnp.float32(HEAD_DIM))
    p = jax.nn.softmax(scores, axis=-1)
    o = jnp.einsum("bhts,sbhd->tbhd", p, v).reshape(T, B, D)
    return o @ wo + bo


def _ref_forward(tgt, memory, p):
    D = D_MODEL
    sa_wq, sa_wk, sa_wv = p["sa_wqkv"][:, :D], p["sa_wqkv"][:, D:2 * D], p["sa_wqkv"][:, 2 * D:]
    sa_bq, sa_bk, sa_bv = p["sa_bqkv"][:, :D], p["sa_bqkv"][:, D:2 * D], p["sa_bqkv"][:, 2 * D:]
    ca_wk, ca_wv = p["ca_wkv"][:, :D], p["ca_wkv"][:, D:]
    ca_bk, ca_bv = p["ca_bkv"][:, :D], p["ca_bkv"][:, D:]

    x = tgt
    sa = _ref_mha(x, x, sa_wq, sa_bq, sa_wk, sa_bk, sa_wv, sa_bv, p["sa_wo"], p["sa_bo"])
    x = _ref_ln(x + sa, p["g1"], p["b1"])
    ca = _ref_mha(x, memory, p["ca_wq"], p["ca_bq"], ca_wk, ca_bk, ca_wv, ca_bv,
                  p["ca_wo"], p["ca_bo"])
    x = _ref_ln(x + ca, p["g2"], p["b2"])
    ff = jnp.maximum(x @ p["ff_w1"] + p["ff_b1"], 0.0) @ p["ff_w2"] + p["ff_b2"]
    x = _ref_ln(x + ff, p["g3"], p["b3"])
    return x


def _init_params(key):
    """Deterministic synthetic parameters. Weights stored (in_features, out_features).
    QKV (self-attn) and KV (cross-attn) projections are pre-concatenated along out dim."""
    keys = jax.random.split(key, 16)
    ki = iter(keys)

    def w(shape, scale=0.1):
        return (scale * jax.random.normal(next(ki), shape)).astype(jnp.float32)

    D, F = D_MODEL, DIM_FF
    p = {}
    p["sa_wqkv"] = w((D, 3 * D)); p["sa_bqkv"] = w((1, 3 * D))
    p["sa_wo"] = w((D, D));       p["sa_bo"] = w((1, D))
    p["ca_wq"] = w((D, D));       p["ca_bq"] = w((1, D))
    p["ca_wkv"] = w((D, 2 * D));  p["ca_bkv"] = w((1, 2 * D))
    p["ca_wo"] = w((D, D));       p["ca_bo"] = w((1, D))
    p["ff_w1"] = w((D, F));       p["ff_b1"] = w((1, F))
    p["ff_w2"] = w((F, D));       p["ff_b2"] = w((1, D))
    for i in (1, 2, 3):
        p[f"g{i}"] = jnp.ones((1, D), jnp.float32)
        p[f"b{i}"] = jnp.zeros((1, D), jnp.float32)
    return p


if __name__ == "__main__":
    key = jax.random.PRNGKey(0)
    k_tgt, k_mem, k_par = jax.random.split(key, 3)

    tgt = jax.random.normal(k_tgt, (T_TGT, BATCH, D_MODEL), dtype=jnp.float32)
    memory = jax.random.normal(k_mem, (S_MEM, BATCH, D_MODEL), dtype=jnp.float32)
    params = _init_params(k_par)

    fwd = jax.jit(decoder_layer_forward)
    out = jax.block_until_ready(fwd(tgt, memory, params))
    ref = jax.block_until_ready(_ref_forward(tgt, memory, params))

    # Exact softmax denominator restored -> tight tolerance restored.
    np.testing.assert_allclose(np.asarray(out), np.asarray(ref), rtol=1e-4, atol=1e-4)
    assert out.shape == (T_TGT, BATCH, D_MODEL)

    print("KERNEL_OK")
</pallas_src>

<mosaic_0001>
module attributes {stable_mosaic.version = 11 : i64} {
  func.func @_decoder_layer_kernel(%arg0: memref<16x32xf32, #tpu.memory_space<vmem>>, %arg1: memref<16x32xf32, #tpu.memory_space<vmem>>, %arg2: memref<32x320xf32, #tpu.memory_space<vmem>>, %arg3: memref<64x32xf32, #tpu.memory_space<vmem>>, %arg4: memref<16x128xf32, #tpu.memory_space<vmem>>, %arg5: memref<16x32xf32, #tpu.memory_space<vmem>>) attributes {dimension_semantics = [], scalar_prefetch = 0 : i64, scratch_operands = 0 : i64, tpu.core_type = #tpu.core_type<tc>} {
    %c0 = arith.constant 0 : index
    %c0_0 = arith.constant 0 : index
    %0 = vector.load %arg0[%c0, %c0_0] : memref<16x32xf32, #tpu.memory_space<vmem>>, vector<16x32xf32>
    %c0_1 = arith.constant 0 : index
    %c0_2 = arith.constant 0 : index
    %1 = vector.load %arg1[%c0_1, %c0_2] : memref<16x32xf32, #tpu.memory_space<vmem>>, vector<16x32xf32>
    %c0_3 = arith.constant 0 : index
    %c0_4 = arith.constant 0 : index
    %2 = vector.load %arg2[%c0_3, %c0_4] : memref<32x320xf32, #tpu.memory_space<vmem>>, vector<32x320xf32>
    %c0_5 = arith.constant 0 : index
    %c0_6 = arith.constant 0 : index
    %3 = vector.load %arg3[%c0_5, %c0_6] : memref<64x32xf32, #tpu.memory_space<vmem>>, vector<64x32xf32>
    %c0_7 = arith.constant 0 : index
    %c0_8 = arith.constant 0 : index
    %4 = vector.load %arg4[%c0_7, %c0_8] : memref<16x128xf32, #tpu.memory_space<vmem>>, vector<16x128xf32>
    %5 = vector.extract_strided_slice %2 {offsets = [0, 0], sizes = [32, 96], strides = [1, 1]} : vector<32x320xf32> to vector<32x96xf32>
    %6 = vector.extract_strided_slice %2 {offsets = [0, 96], sizes = [32, 32], strides = [1, 1]} : vector<32x320xf32> to vector<32x32xf32>
    %7 = vector.extract_strided_slice %2 {offsets = [0, 128], sizes = [32, 32], strides = [1, 1]} : vector<32x320xf32> to vector<32x32xf32>
    %8 = vector.extract_strided_slice %2 {offsets = [0, 160], sizes = [32, 64], strides = [1, 1]} : vector<32x320xf32> to vector<32x64xf32>
    %9 = vector.extract_strided_slice %2 {offsets = [0, 224], sizes = [32, 32], strides = [1, 1]} : vector<32x320xf32> to vector<32x32xf32>
    %10 = vector.extract_strided_slice %2 {offsets = [0, 256], sizes = [32, 64], strides = [1, 1]} : vector<32x320xf32> to vector<32x64xf32>
    %11 = tpu.iota {dimensions = array<i32: 0>} : vector<16x16xi32>
    %c2_i32 = arith.constant 2 : i32
    %c0_i32 = arith.constant 0 : i32
    %12 = arith.cmpi eq, %c2_i32, %c0_i32 : i32
    %c1_i32 = arith.constant 1 : i32
    %13 = arith.select %12, %c1_i32, %c2_i32 : i32
    %14 = vector.broadcast %13 : i32 to vector<16x16xi32>
    %15 = arith.remsi %11, %14 : vector<16x16xi32>
    %c0_i32_9 = arith.constant 0 : i32
    %16 = vector.broadcast %c0_i32_9 : i32 to vector<16x16xi32>
    %17 = arith.cmpi ne, %15, %16 : vector<16x16xi32>
    %c0_i32_10 = arith.constant 0 : i32
    %18 = vector.broadcast %c0_i32_10 : i32 to vector<16x16xi32>
    %19 = arith.cmpi slt, %15, %18 : vector<16x16xi32>
    %c0_i32_11 = arith.constant 0 : i32
    %20 = arith.cmpi slt, %13, %c0_i32_11 : i32
    %21 = vector.broadcast %20 : i1 to vector<16x16xi1>
    %22 = vector.broadcast %21 : vector<16x16xi1> to vector<16x16xi1>
    %23 = arith.xori %19, %22 : vector<16x16xi1>
    %24 = arith.andi %23, %17 : vector<16x16xi1>
    %25 = vector.broadcast %13 : i32 to vector<16x16xi32>
    %26 = arith.addi %15, %25 : vector<16x16xi32>
    %27 = arith.select %24, %26, %15 : vector<16x16xi1>, vector<16x16xi32>
    %28 = tpu.iota {dimensions = array<i32: 1>} : vector<16x16xi32>
    %c2_i32_12 = arith.constant 2 : i32
    %c0_i32_13 = arith.constant 0 : i32
    %29 = arith.cmpi eq, %c2_i32_12, %c0_i32_13 : i32
    %c1_i32_14 = arith.constant 1 : i32
    %30 = arith.select %29, %c1_i32_14, %c2_i32_12 : i32
    %31 = vector.broadcast %30 : i32 to vector<16x16xi32>
    %32 = arith.remsi %28, %31 : vector<16x16xi32>
    %c0_i32_15 = arith.constant 0 : i32
    %33 = vector.broadcast %c0_i32_15 : i32 to vector<16x16xi32>
    %34 = arith.cmpi ne, %32, %33 : vector<16x16xi32>
    %c0_i32_16 = arith.constant 0 : i32
    %35 = vector.broadcast %c0_i32_16 : i32 to vector<16x16xi32>
    %36 = arith.cmpi slt, %32, %35 : vector<16x16xi32>
    %c0_i32_17 = arith.constant 0 : i32
    %37 = arith.cmpi slt, %30, %c0_i32_17 : i32
    %38 = vector.broadcast %37 : i1 to vector<16x16xi1>
    %39 = vector.broadcast %38 : vector<16x16xi1> to vector<16x16xi1>
    %40 = arith.xori %36, %39 : vector<16x16xi1>
    %41 = arith.andi %40, %34 : vector<16x16xi1>
    %42 = vector.broadcast %30 : i32 to vector<16x16xi32>
    %43 = arith.addi %32, %42 : vector<16x16xi32>
    %44 = arith.select %41, %43, %32 : vector<16x16xi1>, vector<16x16xi32>
    %45 = arith.cmpi eq, %27, %44 : vector<16x16xi32>
    %cst = arith.constant 0.000000e+00 : f32
    %cst_18 = arith.constant -1.000000e+30 : f32
    %46 = vector.broadcast %cst : f32 to vector<16x16xf32>
    %47 = vector.broadcast %cst_18 : f32 to vector<16x16xf32>
    %48 = arith.select %45, %46, %47 : vector<16x16xi1>, vector<16x16xf32>
    %cst_19 = arith.constant dense<0.000000e+00> : vector<16x96xf32>
    %49 = tpu.matmul %0, %5, %cst_19 {dimension_numbers = #tpu.dot_dimension_numbers<[1], [0], [0], [1], [0, 0, 1, 1], [], []>} : vector<16x32xf32>, vector<32x96xf32>, vector<16x96xf32> -> vector<16x96xf32>
    %50 = vector.extract_strided_slice %4 {offsets = [0, 0], sizes = [1, 96], strides = [1, 1]} : vector<16x128xf32> to vector<1x96xf32>
    %51 = vector.broadcast %50 : vector<1x96xf32> to vector<16x96xf32>
    %52 = arith.addf %49, %51 : vector<16x96xf32>
    %53 = vector.extract_strided_slice %52 {offsets = [0, 0], sizes = [16, 32], strides = [1, 1]} : vector<16x96xf32> to vector<16x32xf32>
    %54 = vector.extract_strided_slice %52 {offsets = [0, 32], sizes = [16, 32], strides = [1, 1]} : vector<16x96xf32> to vector<16x32xf32>
    %55 = vector.extract_strided_slice %52 {offsets = [0, 64], sizes = [16, 32], strides = [1, 1]} : vector<16x96xf32> to vector<16x32xf32>
    %56 = vector.extract_strided_slice %4 {offsets = [1, 0], sizes = [1, 32], strides = [1, 1]} : vector<16x128xf32> to vector<1x32xf32>
    %57 = vector.extract_strided_slice %53 {offsets = [0, 0], sizes = [16, 8], strides = [1, 1]} : vector<16x32xf32> to vector<16x8xf32>
    %58 = vector.extract_strided_slice %54 {offsets = [0, 0], sizes = [16, 8], strides = [1, 1]} : vector<16x32xf32> to vector<16x8xf32>
    %59 = vector.extract_strided_slice %55 {offsets = [0, 0], sizes = [16, 8], strides = [1, 1]} : vector<16x32xf32> to vector<16x8xf32>
    %cst_20 = arith.constant dense<0.000000e+00> : vector<16x16xf32>
    %60 = tpu.matmul %57, %58, %cst_20 {dimension_numbers = #tpu.dot_dimension_numbers<[1], [1], [0], [0], [0, 0, 1, 0], [], []>} : vector<16x8xf32>, vector<16x8xf32>, vector<16x16xf32> -> vector<16x16xf32>
    %cst_21 = arith.constant 0.353553385 : f32
    %61 = vector.broadcast %cst_21 : f32 to vector<16x16xf32>
    %62 = arith.mulf %60, %61 : vector<16x16xf32>
    %63 = arith.addf %62, %48 : vector<16x16xf32>
    %cst_22 = arith.constant dense<0xFF800000> : vector<16xf32>
    %64 = vector.multi_reduction <maximumf>, %63, %cst_22 [1] : vector<16x16xf32> to vector<16xf32>
    %65 = vector.shape_cast %64 : vector<16xf32> to vector<16x1xf32>
    %66 = vector.broadcast %65 : vector<16x1xf32> to vector<16x16xf32>
    %67 = arith.subf %63, %66 : vector<16x16xf32>
    %68 = math.exp %67 : vector<16x16xf32>
    %cst_23 = arith.constant dense<0.000000e+00> : vector<16xf32>
    %69 = vector.multi_reduction <add>, %68, %cst_23 [1] : vector<16x16xf32> to vector<16xf32>
    %70 = vector.shape_cast %69 : vector<16xf32> to vector<16x1xf32>
    %71 = vector.broadcast %70 : vector<16x1xf32> to vector<16x16xf32>
    %72 = arith.divf %68, %71 : vector<16x16xf32>
    %cst_24 = arith.constant dense<0.000000e+00> : vector<16x8xf32>
    %73 = tpu.matmul %72, %59, %cst_24 {dimension_numbers = #tpu.dot_dimension_numbers<[1], [0], [0], [1], [0, 0, 1, 1], [], []>} : vector<16x16xf32>, vector<16x8xf32>, vector<16x8xf32> -> vector<16x8xf32>
    %74 = vector.extract_strided_slice %53 {offsets = [0, 8], sizes = [16, 8], strides = [1, 1]} : vector<16x32xf32> to vector<16x8xf32>
    %75 = vector.extract_strided_slice %54 {offsets = [0, 8], sizes = [16, 8], strides = [1, 1]} : vector<16x32xf32> to vector<16x8xf32>
    %76 = vector.extract_strided_slice %55 {offsets = [0, 8], sizes = [16, 8], strides = [1, 1]} : vector<16x32xf32> to vector<16x8xf32>
    %cst_25 = arith.constant dense<0.000000e+00> : vector<16x16xf32>
    %77 = tpu.matmul %74, %75, %cst_25 {dimension_numbers = #tpu.dot_dimension_numbers<[1], [1], [0], [0], [0, 0, 1, 0], [], []>} : vector<16x8xf32>, vector<16x8xf32>, vector<16x16xf32> -> vector<16x16xf32>
    %cst_26 = arith.constant 0.353553385 : f32
    %78 = vector.broadcast %cst_26 : f32 to vector<16x16xf32>
    %79 = arith.mulf %77, %78 : vector<16x16xf32>
    %80 = arith.addf %79, %48 : vector<16x16xf32>
    %cst_27 = arith.constant dense<0xFF800000> : vector<16xf32>
    %81 = vector.multi_reduction <maximumf>, %80, %cst_27 [1] : vector<16x16xf32> to vector<16xf32>
    %82 = vector.shape_cast %81 : vector<16xf32> to vector<16x1xf32>
    %83 = vector.broadcast %82 : vector<16x1xf32> to vector<16x16xf32>
    %84 = arith.subf %80, %83 : vector<16x16xf32>
    %85 = math.exp %84 : vector<16x16xf32>
    %cst_28 = arith.constant dense<0.000000e+00> : vector<16xf32>
    %86 = vector.multi_reduction <add>, %85, %cst_28 [1] : vector<16x16xf32> to vector<16xf32>
    %87 = vector.shape_cast %86 : vector<16xf32> to vector<16x1xf32>
    %88 = vector.broadcast %87 : vector<16x1xf32> to vector<16x16xf32>
    %89 = arith.divf %85, %88 : vector<16x16xf32>
    %cst_29 = arith.constant dense<0.000000e+00> : vector<16x8xf32>
    %90 = tpu.matmul %89, %76, %cst_29 {dimension_numbers = #tpu.dot_dimension_numbers<[1], [0], [0], [1], [0, 0, 1, 1], [], []>} : vector<16x16xf32>, vector<16x8xf32>, vector<16x8xf32> -> vector<16x8xf32>
    %91 = vector.extract_strided_slice %53 {offsets = [0, 16], sizes = [16, 8], strides = [1, 1]} : vector<16x32xf32> to vector<16x8xf32>
    %92 = vector.extract_strided_slice %54 {offsets = [0, 16], sizes = [16, 8], strides = [1, 1]} : vector<16x32xf32> to vector<16x8xf32>
    %93 = vector.extract_strided_slice %55 {offsets = [0, 16], sizes = [16, 8], strides = [1, 1]} : vector<16x32xf32> to vector<16x8xf32>
    %cst_30 = arith.constant dense<0.000000e+00> : vector<16x16xf32>
    %94 = tpu.matmul %91, %92, %cst_30 {dimension_numbers = #tpu.dot_dimension_numbers<[1], [1], [0], [0], [0, 0, 1, 0], [], []>} : vector<16x8xf32>, vector<16x8xf32>, vector<16x16xf32> -> vector<16x16xf32>
    %cst_31 = arith.constant 0.353553385 : f32
    %95 = vector.broadcast %cst_31 : f32 to vector<16x16xf32>
    %96 = arith.mulf %94, %95 : vector<16x16xf32>
    %97 = arith.addf %96, %48 : vector<16x16xf32>
    %cst_32 = arith.constant dense<0xFF800000> : vector<16xf32>
    %98 = vector.multi_reduction <maximumf>, %97, %cst_32 [1] : vector<16x16xf32> to vector<16xf32>
    %99 = vector.shape_cast %98 : vector<16xf32> to vector<16x1xf32>
    %100 = vector.broadcast %99 : vector<16x1xf32> to vector<16x16xf32>
    %101 = arith.subf %97, %100 : vector<16x16xf32>
    %102 = math.exp %101 : vector<16x16xf32>
    %cst_33 = arith.constant dense<0.000000e+00> : vector<16xf32>
    %103 = vector.multi_reduction <add>, %102, %cst_33 [1] : vector<16x16xf32> to vector<16xf32>
    %104 = vector.shape_cast %103 : vector<16xf32> to vector<16x1xf32>
    %105 = vector.broadcast %104 : vector<16x1xf32> to vector<16x16xf32>
    %106 = arith.divf %102, %105 : vector<16x16xf32>
    %cst_34 = arith.constant dense<0.000000e+00> : vector<16x8xf32>
    %107 = tpu.matmul %106, %93, %cst_34 {dimension_numbers = #tpu.dot_dimension_numbers<[1], [0], [0], [1], [0, 0, 1, 1], [], []>} : vector<16x16xf32>, vector<16x8xf32>, vector<16x8xf32> -> vector<16x8xf32>
    %108 = vector.extract_strided_slice %53 {offsets = [0, 24], sizes = [16, 8], strides = [1, 1]} : vector<16x32xf32> to vector<16x8xf32>
    %109 = vector.extract_strided_slice %54 {offsets = [0, 24], sizes = [16, 8], strides = [1, 1]} : vector<16x32xf32> to vector<16x8xf32>
    %110 = vector.extract_strided_slice %55 {offsets = [0, 24], sizes = [16, 8], strides = [1, 1]} : vector<16x32xf32> to vector<16x8xf32>
    %cst_35 = arith.constant dense<0.000000e+00> : vector<16x16xf32>
    %111 = tpu.matmul %108, %109, %cst_35 {dimension_numbers = #tpu.dot_dimension_numbers<[1], [1], [0], [0], [0, 0, 1, 0], [], []>} : vector<16x8xf32>, vector<16x8xf32>, vector<16x16xf32> -> vector<16x16xf32>
    %cst_36 = arith.constant 0.353553385 : f32
    %112 = vector.broadcast %cst_36 : f32 to vector<16x16xf32>
    %113 = arith.mulf %111, %112 : vector<16x16xf32>
    %114 = arith.addf %113, %48 : vector<16x16xf32>
    %cst_37 = arith.constant dense<0xFF800000> : vector<16xf32>
    %115 = vector.multi_reduction <maximumf>, %114, %cst_37 [1] : vector<16x16xf32> to vector<16xf32>
    %116 = vector.shape_cast %115 : vector<16xf32> to vector<16x1xf32>
    %117 = vector.broadcast %116 : vector<16x1xf32> to vector<16x16xf32>
    %118 = arith.subf %114, %117 : vector<16x16xf32>
    %119 = math.exp %118 : vector<16x16xf32>
    %cst_38 = arith.constant dense<0.000000e+00> : vector<16xf32>
    %120 = vector.multi_reduction <add>, %119, %cst_38 [1] : vector<16x16xf32> to vector<16xf32>
    %121 = vector.shape_cast %120 : vector<16xf32> to vector<16x1xf32>
    %122 = vector.broadcast %121 : vector<16x1xf32> to vector<16x16xf32>
    %123 = arith.divf %119, %122 : vector<16x16xf32>
    %cst_39 = arith.constant dense<0.000000e+00> : vector<16x8xf32>
    %124 = tpu.matmul %123, %110, %cst_39 {dimension_numbers = #tpu.dot_dimension_numbers<[1], [0], [0], [1], [0, 0, 1, 1], [], []>} : vector<16x16xf32>, vector<16x8xf32>, vector<16x8xf32> -> vector<16x8xf32>
    %125 = tpu.concatenate %73, %90, %107, %124 in 1 : vector<16x8xf32>, vector<16x8xf32>, vector<16x8xf32>, vector<16x8xf32> -> vector<16x32xf32>
    %cst_40 = arith.constant dense<0.000000e+00> : vector<16x32xf32>
    %126 = tpu.matmul %125, %6, %cst_40 {dimension_numbers = #tpu.dot_dimension_numbers<[1], [0], [0], [1], [0, 0, 1, 1], [], []>} : vector<16x32xf32>, vector<32x32xf32>, vector<16x32xf32> -> vector<16x32xf32>
    %127 = vector.broadcast %56 : vector<1x32xf32> to vector<16x32xf32>
    %128 = arith.addf %126, %127 : vector<16x32xf32>
    %129 = arith.addf %0, %128 : vector<16x32xf32>
    %130 = vector.extract_strided_slice %4 {offsets = [7, 0], sizes = [1, 32], strides = [1, 1]} : vector<16x128xf32> to vector<1x32xf32>
    %131 = vector.extract_strided_slice %4 {offsets = [8, 0], sizes = [1, 32], strides = [1, 1]} : vector<16x128xf32> to vector<1x32xf32>
    %cst_41 = arith.constant dense<0.000000e+00> : vector<16xf32>
    %132 = vector.multi_reduction <add>, %129, %cst_41 [1] : vector<16x32xf32> to vector<16xf32>
    %133 = vector.shape_cast %132 : vector<16xf32> to vector<16x1xf32>
    %cst_42 = arith.constant 3.200000e+01 : f32
    %134 = vector.broadcast %cst_42 : f32 to vector<16x1xf32>
    %135 = arith.divf %133, %134 : vector<16x1xf32>
    %136 = vector.broadcast %135 : vector<16x1xf32> to vector<16x32xf32>
    %137 = arith.subf %129, %136 : vector<16x32xf32>
    %138 = arith.mulf %137, %137 : vector<16x32xf32>
    %cst_43 = arith.constant dense<0.000000e+00> : vector<16xf32>
    %139 = vector.multi_reduction <add>, %138, %cst_43 [1] : vector<16x32xf32> to vector<16xf32>
    %140 = vector.shape_cast %139 : vector<16xf32> to vector<16x1xf32>
    %cst_44 = arith.constant 3.200000e+01 : f32
    %141 = vector.broadcast %cst_44 : f32 to vector<16x1xf32>
    %142 = arith.divf %140, %141 : vector<16x1xf32>
    %cst_45 = arith.constant 9.99999974E-6 : f32
    %143 = vector.broadcast %cst_45 : f32 to vector<16x1xf32>
    %144 = arith.addf %142, %143 : vector<16x1xf32>
    %145 = math.rsqrt %144 : vector<16x1xf32>
    %146 = vector.broadcast %145 : vector<16x1xf32> to vector<16x32xf32>
    %147 = arith.mulf %137, %146 : vector<16x32xf32>
    %148 = vector.broadcast %130 : vector<1x32xf32> to vector<16x32xf32>
    %149 = arith.mulf %147, %148 : vector<16x32xf32>
    %150 = vector.broadcast %131 : vector<1x32xf32> to vector<16x32xf32>
    %151 = arith.addf %149, %150 : vector<16x32xf32>
    %cst_46 = arith.constant dense<0.000000e+00> : vector<16x32xf32>
    %152 = tpu.matmul %151, %7, %cst_46 {dimension_numbers = #tpu.dot_dimension_numbers<[1], [0], [0], [1], [0, 0, 1, 1], [], []>} : vector<16x32xf32>, vector<32x32xf32>, vector<16x32xf32> -> vector<16x32xf32>
    %153 = vector.extract_strided_slice %4 {offsets = [2, 0], sizes = [1, 32], strides = [1, 1]} : vector<16x128xf32> to vector<1x32xf32>
    %154 = vector.broadcast %153 : vector<1x32xf32> to vector<16x32xf32>
    %155 = arith.addf %152, %154 : vector<16x32xf32>
    %cst_47 = arith.constant dense<0.000000e+00> : vector<16x64xf32>
    %156 = tpu.matmul %1, %8, %cst_47 {dimension_numbers = #tpu.dot_dimension_numbers<[1], [0], [0], [1], [0, 0, 1, 1], [], []>} : vector<16x32xf32>, vector<32x64xf32>, vector<16x64xf32> -> vector<16x64xf32>
    %157 = vector.extract_strided_slice %4 {offsets = [3, 0], sizes = [1, 64], strides = [1, 1]} : vector<16x128xf32> to vector<1x64xf32>
    %158 = vector.broadcast %157 : vector<1x64xf32> to vector<16x64xf32>
    %159 = arith.addf %156, %158 : vector<16x64xf32>
    %160 = vector.extract_strided_slice %159 {offsets = [0, 0], sizes = [16, 32], strides = [1, 1]} : vector<16x64xf32> to vector<16x32xf32>
    %161 = vector.extract_strided_slice %159 {offsets = [0, 32], sizes = [16, 32], strides = [1, 1]} : vector<16x64xf32> to vector<16x32xf32>
    %162 = vector.extract_strided_slice %4 {offsets = [4, 0], sizes = [1, 32], strides = [1, 1]} : vector<16x128xf32> to vector<1x32xf32>
    %163 = vector.extract_strided_slice %155 {offsets = [0, 0], sizes = [16, 8], strides = [1, 1]} : vector<16x32xf32> to vector<16x8xf32>
    %164 = vector.extract_strided_slice %160 {offsets = [0, 0], sizes = [16, 8], strides = [1, 1]} : vector<16x32xf32> to vector<16x8xf32>
    %165 = vector.extract_strided_slice %161 {offsets = [0, 0], sizes = [16, 8], strides = [1, 1]} : vector<16x32xf32> to vector<16x8xf32>
    %cst_48 = arith.constant dense<0.000000e+00> : vector<16x16xf32>
    %166 = tpu.matmul %163, %164, %cst_48 {dimension_numbers = #tpu.dot_dimension_numbers<[1], [1], [0], [0], [0, 0, 1, 0], [], []>} : vector<16x8xf32>, vector<16x8xf32>, vector<16x16xf32> -> vector<16x16xf32>
    %cst_49 = arith.constant 0.353553385 : f32
    %167 = vector.broadcast %cst_49 : f32 to vector<16x16xf32>
    %168 = arith.mulf %166, %167 : vector<16x16xf32>
    %169 = arith.addf %168, %48 : vector<16x16xf32>
    %cst_50 = arith.constant dense<0xFF800000> : vector<16xf32>
    %170 = vector.multi_reduction <maximumf>, %169, %cst_50 [1] : vector<16x16xf32> to vector<16xf32>
    %171 = vector.shape_cast %170 : vector<16xf32> to vector<16x1xf32>
    %172 = vector.broadcast %171 : vector<16x1xf32> to vector<16x16xf32>
    %173 = arith.subf %169, %172 : vector<16x16xf32>
    %174 = math.exp %173 : vector<16x16xf32>
    %cst_51 = arith.constant dense<0.000000e+00> : vector<16xf32>
    %175 = vector.multi_reduction <add>, %174, %cst_51 [1] : vector<16x16xf32> to vector<16xf32>
    %176 = vector.shape_cast %175 : vector<16xf32> to vector<16x1xf32>
    %177 = vector.broadcast %176 : vector<16x1xf32> to vector<16x16xf32>
    %178 = arith.divf %174, %177 : vector<16x16xf32>
    %cst_52 = arith.constant dense<0.000000e+00> : vector<16x8xf32>
    %179 = tpu.matmul %178, %165, %cst_52 {dimension_numbers = #tpu.dot_dimension_numbers<[1], [0], [0], [1], [0, 0, 1, 1], [], []>} : vector<16x16xf32>, vector<16x8xf32>, vector<16x8xf32> -> vector<16x8xf32>
    %180 = vector.extract_strided_slice %155 {offsets = [0, 8], sizes = [16, 8], strides = [1, 1]} : vector<16x32xf32> to vector<16x8xf32>
    %181 = vector.extract_strided_slice %160 {offsets = [0, 8], sizes = [16, 8], strides = [1, 1]} : vector<16x32xf32> to vector<16x8xf32>
    %182 = vector.extract_strided_slice %161 {offsets = [0, 8], sizes = [16, 8], strides = [1, 1]} : vector<16x32xf32> to vector<16x8xf32>
    %cst_53 = arith.constant dense<0.000000e+00> : vector<16x16xf32>
    %183 = tpu.matmul %180, %181, %cst_53 {dimension_numbers = #tpu.dot_dimension_numbers<[1], [1], [0], [0], [0, 0, 1, 0], [], []>} : vector<16x8xf32>, vector<16x8xf32>, vector<16x16xf32> -> vector<16x16xf32>
    %cst_54 = arith.constant 0.353553385 : f32
    %184 = vector.broadcast %cst_54 : f32 to vector<16x16xf32>
    %185 = arith.mulf %183, %184 : vector<16x16xf32>
    %186 = arith.addf %185, %48 : vector<16x16xf32>
    %cst_55 = arith.constant dense<0xFF800000> : vector<16xf32>
    %187 = vector.multi_reduction <maximumf>, %186, %cst_55 [1] : vector<16x16xf32> to vector<16xf32>
    %188 = vector.shape_cast %187 : vector<16xf32> to vector<16x1xf32>
    %189 = vector.broadcast %188 : vector<16x1xf32> to vector<16x16xf32>
    %190 = arith.subf %186, %189 : vector<16x16xf32>
    %191 = math.exp %190 : vector<16x16xf32>
    %cst_56 = arith.constant dense<0.000000e+00> : vector<16xf32>
    %192 = vector.multi_reduction <add>, %191, %cst_56 [1] : vector<16x16xf32> to vector<16xf32>
    %193 = vector.shape_cast %192 : vector<16xf32> to vector<16x1xf32>
    %194 = vector.broadcast %193 : vector<16x1xf32> to vector<16x16xf32>
    %195 = arith.divf %191, %194 : vector<16x16xf32>
    %cst_57 = arith.constant dense<0.000000e+00> : vector<16x8xf32>
    %196 = tpu.matmul %195, %182, %cst_57 {dimension_numbers = #tpu.dot_dimension_numbers<[1], [0], [0], [1], [0, 0, 1, 1], [], []>} : vector<16x16xf32>, vector<16x8xf32>, vector<16x8xf32> -> vector<16x8xf32>
    %197 = vector.extract_strided_slice %155 {offsets = [0, 16], sizes = [16, 8], strides = [1, 1]} : vector<16x32xf32> to vector<16x8xf32>
    %198 = vector.extract_strided_slice %160 {offsets = [0, 16], sizes = [16, 8], strides = [1, 1]} : vector<16x32xf32> to vector<16x8xf32>
    %199 = vector.extract_strided_slice %161 {offsets = [0, 16], sizes = [16, 8], strides = [1, 1]} : vector<16x32xf32> to vector<16x8xf32>
    %cst_58 = arith.constant dense<0.000000e+00> : vector<16x16xf32>
    %200 = tpu.matmul %197, %198, %cst_58 {dimension_numbers = #tpu.dot_dimension_numbers<[1], [1], [0], [0], [0, 0, 1, 0], [], []>} : vector<16x8xf32>, vector<16x8xf32>, vector<16x16xf32> -> vector<16x16xf32>
    %cst_59 = arith.constant 0.353553385 : f32
    %201 = vector.broadcast %cst_59 : f32 to vector<16x16xf32>
    %202 = arith.mulf %200, %201 : vector<16x16xf32>
    %203 = arith.addf %202, %48 : vector<16x16xf32>
    %cst_60 = arith.constant dense<0xFF800000> : vector<16xf32>
    %204 = vector.multi_reduction <maximumf>, %203, %cst_60 [1] : vector<16x16xf32> to vector<16xf32>
    %205 = vector.shape_cast %204 : vector<16xf32> to vector<16x1xf32>
    %206 = vector.broadcast %205 : vector<16x1xf32> to vector<16x16xf32>
    %207 = arith.subf %203, %206 : vector<16x16xf32>
    %208 = math.exp %207 : vector<16x16xf32>
    %cst_61 = arith.constant dense<0.000000e+00> : vector<16xf32>
    %209 = vector.multi_reduction <add>, %208, %cst_61 [1] : vector<16x16xf32> to vector<16xf32>
    %210 = vector.shape_cast %209 : vector<16xf32> to vector<16x1xf32>
    %211 = vector.broadcast %210 : vector<16x1xf32> to vector<16x16xf32>
    %212 = arith.divf %208, %211 : vector<16x16xf32>
    %cst_62 = arith.constant dense<0.000000e+00> : vector<16x8xf32>
    %213 = tpu.matmul %212, %199, %cst_62 {dimension_numbers = #tpu.dot_dimension_numbers<[1], [0], [0], [1], [0, 0, 1, 1], [], []>} : vector<16x16xf32>, vector<16x8xf32>, vector<16x8xf32> -> vector<16x8xf32>
    %214 = vector.extract_strided_slice %155 {offsets = [0, 24], sizes = [16, 8], strides = [1, 1]} : vector<16x32xf32> to vector<16x8xf32>
    %215 = vector.extract_strided_slice %160 {offsets = [0, 24], sizes = [16, 8], strides = [1, 1]} : vector<16x32xf32> to vector<16x8xf32>
    %216 = vector.extract_strided_slice %161 {offsets = [0, 24], sizes = [16, 8], strides = [1, 1]} : vector<16x32xf32> to vector<16x8xf32>
    %cst_63 = arith.constant dense<0.000000e+00> : vector<16x16xf32>
    %217 = tpu.matmul %214, %215, %cst_63 {dimension_numbers = #tpu.dot_dimension_numbers<[1], [1], [0], [0], [0, 0, 1, 0], [], []>} : vector<16x8xf32>, vector<16x8xf32>, vector<16x16xf32> -> vector<16x16xf32>
    %cst_64 = arith.constant 0.353553385 : f32
    %218 = vector.broadcast %cst_64 : f32 to vector<16x16xf32>
    %219 = arith.mulf %217, %218 : vector<16x16xf32>
    %220 = arith.addf %219, %48 : vector<16x16xf32>
    %cst_65 = arith.constant dense<0xFF800000> : vector<16xf32>
    %221 = vector.multi_reduction <maximumf>, %220, %cst_65 [1] : vector<16x16xf32> to vector<16xf32>
    %222 = vector.shape_cast %221 : vector<16xf32> to vector<16x1xf32>
    %223 = vector.broadcast %222 : vector<16x1xf32> to vector<16x16xf32>
    %224 = arith.subf %220, %223 : vector<16x16xf32>
    %225 = math.exp %224 : vector<16x16xf32>
    %cst_66 = arith.constant dense<0.000000e+00> : vector<16xf32>
    %226 = vector.multi_reduction <add>, %225, %cst_66 [1] : vector<16x16xf32> to vector<16xf32>
    %227 = vector.shape_cast %226 : vector<16xf32> to vector<16x1xf32>
    %228 = vector.broadcast %227 : vector<16x1xf32> to vector<16x16xf32>
    %229 = arith.divf %225, %228 : vector<16x16xf32>
    %cst_67 = arith.constant dense<0.000000e+00> : vector<16x8xf32>
    %230 = tpu.matmul %229, %216, %cst_67 {dimension_numbers = #tpu.dot_dimension_numbers<[1], [0], [0], [1], [0, 0, 1, 1], [], []>} : vector<16x16xf32>, vector<16x8xf32>, vector<16x8xf32> -> vector<16x8xf32>
    %231 = tpu.concatenate %179, %196, %213, %230 in 1 : vector<16x8xf32>, vector<16x8xf32>, vector<16x8xf32>, vector<16x8xf32> -> vector<16x32xf32>
    %cst_68 = arith.constant dense<0.000000e+00> : vector<16x32xf32>
    %232 = tpu.matmul %231, %9, %cst_68 {dimension_numbers = #tpu.dot_dimension_numbers<[1], [0], [0], [1], [0, 0, 1, 1], [], []>} : vector<16x32xf32>, vector<32x32xf32>, vector<16x32xf32> -> vector<16x32xf32>
    %233 = vector.broadcast %162 : vector<1x32xf32> to vector<16x32xf32>
    %234 = arith.addf %232, %233 : vector<16x32xf32>
    %235 = arith.addf %151, %234 : vector<16x32xf32>
    %236 = vector.extract_strided_slice %4 {offsets = [9, 0], sizes = [1, 32], strides = [1, 1]} : vector<16x128xf32> to vector<1x32xf32>
    %237 = vector.extract_strided_slice %4 {offsets = [10, 0], sizes = [1, 32], strides = [1, 1]} : vector<16x128xf32> to vector<1x32xf32>
    %cst_69 = arith.constant dense<0.000000e+00> : vector<16xf32>
    %238 = vector.multi_reduction <add>, %235, %cst_69 [1] : vector<16x32xf32> to vector<16xf32>
    %239 = vector.shape_cast %238 : vector<16xf32> to vector<16x1xf32>
    %cst_70 = arith.constant 3.200000e+01 : f32
    %240 = vector.broadcast %cst_70 : f32 to vector<16x1xf32>
    %241 = arith.divf %239, %240 : vector<16x1xf32>
    %242 = vector.broadcast %241 : vector<16x1xf32> to vector<16x32xf32>
    %243 = arith.subf %235, %242 : vector<16x32xf32>
    %244 = arith.mulf %243, %243 : vector<16x32xf32>
    %cst_71 = arith.constant dense<0.000000e+00> : vector<16xf32>
    %245 = vector.multi_reduction <add>, %244, %cst_71 [1] : vector<16x32xf32> to vector<16xf32>
    %246 = vector.shape_cast %245 : vector<16xf32> to vector<16x1xf32>
    %cst_72 = arith.constant 3.200000e+01 : f32
    %247 = vector.broadcast %cst_72 : f32 to vector<16x1xf32>
    %248 = arith.divf %246, %247 : vector<16x1xf32>
    %cst_73 = arith.constant 9.99999974E-6 : f32
    %249 = vector.broadcast %cst_73 : f32 to vector<16x1xf32>
    %250 = arith.addf %248, %249 : vector<16x1xf32>
    %251 = math.rsqrt %250 : vector<16x1xf32>
    %252 = vector.broadcast %251 : vector<16x1xf32> to vector<16x32xf32>
    %253 = arith.mulf %243, %252 : vector<16x32xf32>
    %254 = vector.broadcast %236 : vector<1x32xf32> to vector<16x32xf32>
    %255 = arith.mulf %253, %254 : vector<16x32xf32>
    %256 = vector.broadcast %237 : vector<1x32xf32> to vector<16x32xf32>
    %257 = arith.addf %255, %256 : vector<16x32xf32>
    %cst_74 = arith.constant dense<0.000000e+00> : vector<16x64xf32>
    %258 = tpu.matmul %257, %10, %cst_74 {dimension_numbers = #tpu.dot_dimension_numbers<[1], [0], [0], [1], [0, 0, 1, 1], [], []>} : vector<16x32xf32>, vector<32x64xf32>, vector<16x64xf32> -> vector<16x64xf32>
    %259 = vector.extract_strided_slice %4 {offsets = [5, 0], sizes = [1, 64], strides = [1, 1]} : vector<16x128xf32> to vector<1x64xf32>
    %260 = vector.broadcast %259 : vector<1x64xf32> to vector<16x64xf32>
    %261 = arith.addf %258, %260 : vector<16x64xf32>
    %cst_75 = arith.constant 0.000000e+00 : f32
    %262 = vector.broadcast %cst_75 : f32 to vector<16x64xf32>
    %263 = arith.maximumf %261, %262 : vector<16x64xf32>
    %cst_76 = arith.constant dense<0.000000e+00> : vector<16x32xf32>
    %264 = tpu.matmul %263, %3, %cst_76 {dimension_numbers = #tpu.dot_dimension_numbers<[1], [0], [0], [1], [0, 0, 1, 1], [], []>} : vector<16x64xf32>, vector<64x32xf32>, vector<16x32xf32> -> vector<16x32xf32>
    %265 = vector.extract_strided_slice %4 {offsets = [6, 0], sizes = [1, 32], strides = [1, 1]} : vector<16x128xf32> to vector<1x32xf32>
    %266 = vector.broadcast %265 : vector<1x32xf32> to vector<16x32xf32>
    %267 = arith.addf %264, %266 : vector<16x32xf32>
    %268 = arith.addf %257, %267 : vector<16x32xf32>
    %269 = vector.extract_strided_slice %4 {offsets = [11, 0], sizes = [1, 32], strides = [1, 1]} : vector<16x128xf32> to vector<1x32xf32>
    %270 = vector.extract_strided_slice %4 {offsets = [12, 0], sizes = [1, 32], strides = [1, 1]} : vector<16x128xf32> to vector<1x32xf32>
    %cst_77 = arith.constant dense<0.000000e+00> : vector<16xf32>
    %271 = vector.multi_reduction <add>, %268, %cst_77 [1] : vector<16x32xf32> to vector<16xf32>
    %272 = vector.shape_cast %271 : vector<16xf32> to vector<16x1xf32>
    %cst_78 = arith.constant 3.200000e+01 : f32
    %273 = vector.broadcast %cst_78 : f32 to vector<16x1xf32>
    %274 = arith.divf %272, %273 : vector<16x1xf32>
    %275 = vector.broadcast %274 : vector<16x1xf32> to vector<16x32xf32>
    %276 = arith.subf %268, %275 : vector<16x32xf32>
    %277 = arith.mulf %276, %276 : vector<16x32xf32>
    %cst_79 = arith.constant dense<0.000000e+00> : vector<16xf32>
    %278 = vector.multi_reduction <add>, %277, %cst_79 [1] : vector<16x32xf32> to vector<16xf32>
    %279 = vector.shape_cast %278 : vector<16xf32> to vector<16x1xf32>
    %cst_80 = arith.constant 3.200000e+01 : f32
    %280 = vector.broadcast %cst_80 : f32 to vector<16x1xf32>
    %281 = arith.divf %279, %280 : vector<16x1xf32>
    %cst_81 = arith.constant 9.99999974E-6 : f32
    %282 = vector.broadcast %cst_81 : f32 to vector<16x1xf32>
    %283 = arith.addf %281, %282 : vector<16x1xf32>
    %284 = math.rsqrt %283 : vector<16x1xf32>
    %285 = vector.broadcast %284 : vector<16x1xf32> to vector<16x32xf32>
    %286 = arith.mulf %276, %285 : vector<16x32xf32>
    %287 = vector.broadcast %269 : vector<1x32xf32> to vector<16x32xf32>
    %288 = arith.mulf %286, %287 : vector<16x32xf32>
    %289 = vector.broadcast %270 : vector<1x32xf32> to vector<16x32xf32>
    %290 = arith.addf %288, %289 : vector<16x32xf32>
    %c0_82 = arith.constant 0 : index
    %c0_83 = arith.constant 0 : index
    %291 = vector.load %arg5[%c0_82, %c0_83] : memref<16x32xf32, #tpu.memory_space<vmem>>, vector<16x32xf32>
    tpu.vector_store %arg5[%c0_82, %c0_83], %290 {strides = array<i32>} : memref<16x32xf32, #tpu.memory_space<vmem>>, vector<16x32xf32>,
    return
  }
}

</mosaic_0001>

<llo_original>
// kernel: decoder_layer_forward.1
$region0: #{decoder_layer_forward.1}
  #allocation0 [shape = 'u32[]', space=smem, size = 0x4, offset = 0x4, fixed_abs, tag = 'smem constant byte address 0x4 - core index']
  #allocation1 [shape = 'u32[144,128]{1,0:T(1,128)}', space=vmem, size = 0x12000, scoped, tag = 'internal scratch']
  %s0 = inlined_call_operand.vmem [shape: f32[16,32], index: 0, kind: input, shape index: {}]
  %s1 = inlined_call_operand.vmem [shape: f32[16,32], index: 1, kind: input, shape index: {}]
  %s2 = inlined_call_operand.vmem [shape: f32[32,320], index: 2, kind: input, shape index: {}]
  %s3 = inlined_call_operand.vmem [shape: f32[64,32], index: 3, kind: input, shape index: {}]
  %s4 = inlined_call_operand.vmem [shape: f32[16,128], index: 4, kind: input, shape index: {}]
  %s5 = inlined_call_operand.hbm [shape: f32[16,32], index: 5, kind: output, shape index: {}]
  %s6 = sld [smem:[#allocation0]]
  $region30: #{decoder_layer_forward.1} parent=0
    _
  %s8 = ssub.s32 1, %s6
  %s9 = scalar_select 0, %s8, %s6
  $region1: #{decoder_layer_forward.1} parent=0
    #allocation2 [shape = 'u8[8192]{0}', space=vmem, size = 0x2000, scoped, tag = 'output window, operand 0, single buffered']
    #allocation3 [shape = 's32[1]{0}', space=sflag, size = 0x4, scoped, tag = 'scoped memory for decoder_layer_forward.1']
    %10 = vsyncpa [#allocation3], 0
    // Predicated region
    $region2: #{decoder_layer_forward.1} parent=1 // pred_check
      _
    $region3: #{decoder_layer_forward.1} parent=1 // pred_check_branch
      %12 = sbr.rel (0) target = $region5
    $region4: #{decoder_layer_forward.1} parent=1 // pred_region
      _
    $region5: #{decoder_layer_forward.1} parent=1 // pred_fallthru
      _
    // Predicated region
    $region6: #{decoder_layer_forward.1} parent=1 // pred_check
      _
    $region7: #{decoder_layer_forward.1} parent=1 // pred_check_branch
      %14 = sbr.rel (0) target = $region9
    $region8: #{decoder_layer_forward.1} parent=1 // pred_region
      _
    $region9: #{decoder_layer_forward.1} parent=1 // pred_fallthru
      _
    // Predicated region
    $region10: #{decoder_layer_forward.1} parent=1 // pred_check
      _
    $region11: #{decoder_layer_forward.1} parent=1 // pred_check_branch
      %16 = sbr.rel (0) target = $region13
    $region12: #{decoder_layer_forward.1} parent=1 // pred_region
      _
    $region13: #{decoder_layer_forward.1} parent=1 // pred_fallthru
      _
    // Predicated region
    $region14: #{decoder_layer_forward.1} parent=1 // pred_check
      _
    $region15: #{decoder_layer_forward.1} parent=1 // pred_check_branch
      %18 = sbr.rel (0) target = $region17
    $region16: #{decoder_layer_forward.1} parent=1 // pred_region
      _
    $region17: #{decoder_layer_forward.1} parent=1 // pred_fallthru
      _
    // Predicated region
    $region18: #{decoder_layer_forward.1} parent=1 // pred_check
      _
    $region19: #{decoder_layer_forward.1} parent=1 // pred_check_branch
      %20 = sbr.rel (0) target = $region21
    $region20: #{decoder_layer_forward.1} parent=1 // pred_region
      _
    $region21: #{decoder_layer_forward.1} parent=1 // pred_fallthru
      _
    %v21 = vld [vmem:[%s0] sm:$0xff]
    %v22 = vld [vmem:[%s0 + $0x8] sm:$0xff]
    %v23 = vld [vmem:[%s1] sm:$0xff]
    %v24 = vld [vmem:[%s1 + $0x8] sm:$0xff]
    %v25 = vld [vmem:[%s2] sm:$0xff]
    %v26 = vld [vmem:[%s2 + $0x8] sm:$0xff]
    %v27 = vld [vmem:[%s2 + $0x10] sm:$0xff]
    %v28 = vld [vmem:[%s2 + $0x18] sm:$0xff]
    %v29 = vld [vmem:[%s2 + $0x20] sm:$0xff]
    %v30 = vld [vmem:[%s2 + $0x28] sm:$0xff]
    %v31 = vld [vmem:[%s2 + $0x30] sm:$0xff]
    %v32 = vld [vmem:[%s2 + $0x38] sm:$0xff]
    %v33 = vld [vmem:[%s2 + $0x40] sm:$0xff]
    %v34 = vld [vmem:[%s2 + $0x48] sm:$0xff]
    %v35 = vld [vmem:[%s2 + $0x50] sm:$0xff]
    %v36 = vld [vmem:[%s2 + $0x58] sm:$0xff]
    %v37 = vld [vmem:[%s3] sm:$0xff]
    %v38 = vld [vmem:[%s3 + $0x8] sm:$0xff]
    %v39 = vld [vmem:[%s3 + $0x10] sm:$0xff]
    %v40 = vld [vmem:[%s3 + $0x18] sm:$0xff]
    %v41 = vld [vmem:[%s3 + $0x20] sm:$0xff]
    %v42 = vld [vmem:[%s3 + $0x28] sm:$0xff]
    %v43 = vld [vmem:[%s3 + $0x30] sm:$0xff]
    %v44 = vld [vmem:[%s3 + $0x38] sm:$0xff]
    %v45 = vld [vmem:[%s4] sm:$0xff]
    %v46 = vld [vmem:[%s4 + $0x8] sm:$0xff]
    %v47 = vlaneseq
    %v48 = vshrl.u32 %v47, 7
    %v49 = vadd.s32 %v48, 8
    %vm50 = vcmp.lt.s32.totalorder %v48, 0
    %v51 = vsub.s32 0, %v48
    %v52 = vsel %vm50, %v51, %v48
    %v53 = vshrl.u32 %v52, 1
    %v54 = vand.u32 %v52, 1
    %v55 = vsub.s32 0, %v54
    %v56 = vsel %vm50, %v55, %v54
    %vm57 = vcmp.lt.s32.totalorder %v49, 0
    %v58 = vsub.s32 0, %v49
    %v59 = vsel %vm57, %v58, %v49
    %v60 = vshrl.u32 %v59, 1
    %v61 = vand.u32 %v59, 1
    %v62 = vsub.s32 0, %v61
    %v63 = vsel %vm57, %v62, %v61
    %vm64 = vcmp.ne.s32.totalorder %v56, 0
    %vm65 = vcmp.ne.s32.totalorder %v63, 0
    %vm66 = vcmp.lt.s32.totalorder %v56, 0
    %vm67 = vcmp.lt.s32.totalorder %v63, 0
    %vm68 = vmand %vm66, %vm64
    %vm69 = vmand %vm67, %vm65
    %v70 = vadd.s32 %v56, 2
    %v71 = vadd.s32 %v63, 2
    %v72 = vsel %vm68, %v70, %v56
    %v73 = vsel %vm69, %v71, %v63
    %v74 = vlaneseq
    %v75 = vand.u32 %v74, 127
    %vm76 = vcmp.lt.s32.totalorder %v75, 0
    %v77 = vsub.s32 0, %v75
    %v78 = vsel %vm76, %v77, %v75
    %v79 = vshrl.u32 %v78, 1
    %v80 = vand.u32 %v78, 1
    %v81 = vsub.s32 0, %v80
    %v82 = vsel %vm76, %v81, %v80
    %vm83 = vcmp.ne.s32.totalorder %v82, 0
    %vm84 = vcmp.lt.s32.totalorder %v82, 0
    %vm85 = vmand %vm84, %vm83
    %v86 = vadd.s32 %v82, 2
    %v87 = vsel %vm85, %v86, %v82
    %vm88 = vcmp.eq.s32.totalorder %v72, %v87
    %vm89 = vcmp.eq.s32.totalorder %v73, %v87
    %v90 = vsel %vm88, 0.0, -1e+30
    %v91 = vsel %vm89, 0.0, -1e+30
    %v92 = vlaneseq
    %v93 = vshrl.u32 %v92, 7
    %v94 = vsub.s32 0, %v93
    %v95 = vrot.slane %v45, %v94
    %vm96 = vcmask 261120
    %v98 = vsel %vm96, %v21, 0
    %v101 = vsel %vm96, %v22, 0
    %103 = vmatprep.subr.mxu0 0.0
    %104 = vmatpush1.msra.mxu0 %v25
    %105 = vmatprep.subr.mxu0 0.0
    %106 = vmatpush1.msra.mxu0 %v28
    %107 = vmatprep.subr.mxu0 0.0
    %108 = vmatpush1.msra.mxu0 %v31
    %109 = vmatprep.subr.mxu0 0.0
    %110 = vmatpush1.msra.mxu0 %v34
    %111 = vmatprep.subr.mxu0 0.0
    %112 = vmatpush1.msra.mxu0 0.0
    %113 = vmatprep.subr.mxu0 0.0
    %114 = vmatpush1.msra.mxu0 0.0
    %115 = vmatprep.subr.mxu0 0.0
    %116 = vmatpush1.msra.mxu0 0.0
    %117 = vmatprep.subr.mxu0 0.0
    %118 = vmatpush1.msra.mxu0 0.0
    %119 = vmatprep.subr.mxu0 0.0
    %120 = vmatpush1.msra.mxu0 0.0
    %121 = vmatprep.subr.mxu0 0.0
    %122 = vmatpush1.msra.mxu0 0.0
    %123 = vmatprep.subr.mxu0 0.0
    %124 = vmatpush1.msra.mxu0 0.0
    %125 = vmatprep.subr.mxu0 0.0
    %126 = vmatpush1.msra.mxu0 0.0
    %127 = vmatprep.subr.mxu0 0.0
    %128 = vmatpush1.msra.mxu0 0.0
    %129 = vmatprep.subr.mxu0 0.0
    %130 = vmatpush1.msra.mxu0 0.0
    %131 = vmatprep.subr.mxu0 0.0
    %132 = vmatpush1.msra.mxu0 0.0
    %133 = vmatprep.subr.mxu0 0.0
    %134 = vmatpush1.msra.mxu0 0.0
    %135 = vmatprep.subr.mxu0 0.0
    %136 = vmatpush1.msra.mxu0 0.0
    %137 = vmatprep.subr.mxu0 0.0
    %138 = vmatpush1.msra.mxu0 0.0
    %139 = vmatprep.subr.mxu0 0.0
    %140 = vmatpush1.msra.mxu0 0.0
    %141 = vmatprep.subr.mxu0 0.0
    %142 = vmatpush1.msra.mxu0 0.0
    %143 = vmatprep.subr.mxu0 0.0
    %144 = vmatpush1.msra.mxu0 0.0
    %145 = vmatprep.subr.mxu0 0.0
    %146 = vmatpush1.msra.mxu0 0.0
    %147 = vmatprep.subr.mxu0 0.0
    %148 = vmatpush1.msra.mxu0 0.0
    %149 = vmatprep.subr.mxu0 0.0
    %150 = vmatpush1.msra.mxu0 0.0
    %151 = vmatprep.subr.mxu0 0.0
    %152 = vmatpush1.msra.mxu0 0.0
    %153 = vmatprep.subr.mxu0 0.0
    %154 = vmatpush1.msra.mxu0 0.0
    %155 = vmatprep.subr.mxu0 0.0
    %156 = vmatpush1.msra.mxu0 0.0
    %157 = vmatprep.subr.mxu0 0.0
    %158 = vmatpush1.msra.mxu0 0.0
    %159 = vmatprep.subr.mxu0 0.0
    %160 = vmatpush1.msra.mxu0 0.0
    %161 = vmatprep.subr.mxu0 0.0
    %162 = vmatpush1.msra.mxu0 0.0
    %163 = vmatprep.subr.mxu0 0.0
    %164 = vmatpush1.msra.mxu0 0.0
    %165 = vmatprep.subr.mxu0 0.0
    %166 = vmatpush1.msra.mxu0 0.0
    %167 = vmatprep.mubr.f32.mxu0 0.0
    %168 = vmatmul.mubr.f32.gmra.mrb[0].mxu0 %v98
    %v169 = vpop.f32.mrb[0].mxu0
    %v170 = vadd.f32 %v95, %v169
    %v171 = vpop.f32.mrb[0].mxu0
    %172 = vmatprep.mubr.f32.mxu0 0.0
    %173 = vmatmul.mubr.f32.gmra.mrb[0].mxu0 %v101
    %v174 = vpop.f32.mrb[0].mxu0
    %v175 = vadd.f32 %v95, %v174
    %v176 = vpop.f32.mrb[0].mxu0
    %177 = vdwg.mxu0
    %180 = vrot.lane.b32.xlu0 %v170, 96
    %v181 = vpop.permute.xlu0 %180
    %182 = vrot.lane.b32.xlu0 %v175, 96
    %v183 = vpop.permute.xlu0 %182
    %vm184 = vcmask 64512
    %v185 = vsel %vm184, %v170, 0
    %v187 = vsel %vm184, %v175, 0
    %v189 = vsel %vm184, %v181, 0
    %v191 = vsel %vm184, %v183, 0
    %193 = vmatprep.subr.mxu0 0.0
    %194 = vmatpush1.xpose.msra.mxu0 %v189
    %195 = vmatprep.subr.mxu0 0.0
    %196 = vmatpush1.xpose.msra.mxu0 %v191
    %197 = vmatprep.subr.mxu0 0.0
    %198 = vmatpush1.xpose.msra.mxu0 0.0
    %199 = vmatprep.subr.mxu0 0.0
    %200 = vmatpush1.xpose.msra.mxu0 0.0
    %201 = vmatprep.subr.mxu0 0.0
    %202 = vmatpush1.xpose.msra.mxu0 0.0
    %203 = vmatprep.subr.mxu0 0.0
    %204 = vmatpush1.xpose.msra.mxu0 0.0
    %205 = vmatprep.subr.mxu0 0.0
    %206 = vmatpush1.xpose.msra.mxu0 0.0
    %207 = vmatprep.subr.mxu0 0.0
    %208 = vmatpush1.xpose.msra.mxu0 0.0
    %209 = vmatprep.subr.mxu0 0.0
    %210 = vmatpush1.xpose.msra.mxu0 0.0
    %211 = vmatprep.subr.mxu0 0.0
    %212 = vmatpush1.xpose.msra.mxu0 0.0
    %213 = vmatprep.subr.mxu0 0.0
    %214 = vmatpush1.xpose.msra.mxu0 0.0
    %215 = vmatprep.subr.mxu0 0.0
    %216 = vmatpush1.xpose.msra.mxu0 0.0
    %217 = vmatprep.subr.mxu0 0.0
    %218 = vmatpush1.xpose.msra.mxu0 0.0
    %219 = vmatprep.subr.mxu0 0.0
    %220 = vmatpush1.xpose.msra.mxu0 0.0
    %221 = vmatprep.subr.mxu0 0.0
    %222 = vmatpush1.xpose.msra.mxu0 0.0
    %223 = vmatprep.subr.mxu0 0.0
    %224 = vmatpush1.xpose.msra.mxu0 0.0
    %225 = vmatprep.subr.mxu0 0.0
    %226 = vmatpush1.xpose.msra.mxu0 0.0
    %227 = vmatprep.subr.mxu0 0.0
    %228 = vmatpush1.xpose.msra.mxu0 0.0
    %229 = vmatprep.subr.mxu0 0.0
    %230 = vmatpush1.xpose.msra.mxu0 0.0
    %231 = vmatprep.subr.mxu0 0.0
    %232 = vmatpush1.xpose.msra.mxu0 0.0
    %233 = vmatprep.subr.mxu0 0.0
    %234 = vmatpush1.xpose.msra.mxu0 0.0
    %235 = vmatprep.subr.mxu0 0.0
    %236 = vmatpush1.xpose.msra.mxu0 0.0
    %237 = vmatprep.subr.mxu0 0.0
    %238 = vmatpush1.xpose.msra.mxu0 0.0
    %239 = vmatprep.subr.mxu0 0.0
    %240 = vmatpush1.xpose.msra.mxu0 0.0
    %241 = vmatprep.subr.mxu0 0.0
    %242 = vmatpush1.xpose.msra.mxu0 0.0
    %243 = vmatprep.subr.mxu0 0.0
    %244 = vmatpush1.xpose.msra.mxu0 0.0
    %245 = vmatprep.subr.mxu0 0.0
    %246 = vmatpush1.xpose.msra.mxu0 0.0
    %247 = vmatprep.subr.mxu0 0.0
    %248 = vmatpush1.xpose.msra.mxu0 0.0
    %249 = vmatprep.subr.mxu0 0.0
    %250 = vmatpush1.xpose.msra.mxu0 0.0
    %251 = vmatprep.subr.mxu0 0.0
    %252 = vmatpush1.xpose.msra.mxu0 0.0
    %253 = vmatprep.subr.mxu0 0.0
    %254 = vmatpush1.xpose.msra.mxu0 0.0
    %255 = vmatprep.subr.mxu0 0.0
    %256 = vmatpush1.xpose.msra.mxu0 0.0
    %257 = vmatprep.mubr.f32.mxu0 0.0
    %258 = vmatmul.mubr.f32.gmra.mrb[0].mxu0 %v185
    %v259 = vpop.f32.mrb[0].mxu0
    %v260 = vadd.f32 0.0, %v259
    %v261 = vpop.f32.mrb[0].mxu0
    %262 = vmatprep.mubr.f32.mxu0 0.0
    %263 = vmatmul.mubr.f32.gmra.mrb[0].mxu0 %v187
    %v264 = vpop.f32.mrb[0].mxu0
    %v265 = vadd.f32 0.0, %v264
    %v266 = vpop.f32.mrb[0].mxu0
    %267 = vdwg.mxu0
    %v268 = vmul.f32 %v260, 0.35355338
    %v269 = vmul.f32 %v265, 0.35355338
    %v270 = vadd.f32 %v268, %v90
    %v271 = vadd.f32 %v269, %v91
    %vm272 = vcmask 130048
    %v273 = vsel %vm272, %v270, -inf
    %274 = vmax.xlane.f32.xlu0 %v273
    %v275 = vpop.xlane.xlu0 %274
    %v276 = vsel %vm272, %v271, -inf
    %277 = vmax.xlane.f32.xlu0 %v276
    %v278 = vpop.xlane.xlu0 %277
    %v279 = vsub.f32 %v270, %v275
    %v280 = vsub.f32 %v271, %v278
    %v281 = vmul.f32 %v279, 1.442695
    %v282 = vpow.pop %v281
    %v283 = vmul.f32 %v280, 1.442695
    %v284 = vpow.pop %v283
    %v285 = vsel %vm272, %v282, 0.0
    %286 = vadd.xlane.f32.xlu0 %v285
    %v287 = vpop.xlane.xlu0 %286
    %v288 = vsel %vm272, %v284, 0.0
    %289 = vadd.xlane.f32.xlu0 %v288
    %v290 = vpop.xlane.xlu0 %289
    %v291 = vrcp.pop %v287
    %v292 = vmul.f32 %v282, %v291
    %v293 = vrcp.pop %v290
    %v294 = vmul.f32 %v284, %v293
    %295 = vrot.lane.b32.xlu0 %v170, 64
    %v296 = vpop.permute.xlu0 %295
    %297 = vrot.lane.b32.xlu0 %v175, 64
    %v298 = vpop.permute.xlu0 %297
    %v302 = vsel %vm272, %v292, 0
    %v305 = vsel %vm272, %v294, 0
    %307 = vmatprep.subr.mxu0 0.0
    %308 = vmatpush1.msra.mxu0 %v296
    %309 = vmatprep.subr.mxu0 0.0
    %310 = vmatpush1.msra.mxu0 %v298
    %311 = vmatprep.subr.mxu0 0.0
    %312 = vmatpush1.msra.mxu0 0.0
    %313 = vmatprep.subr.mxu0 0.0
    %314 = vmatpush1.msra.mxu0 0.0
    %315 = vmatprep.subr.mxu0 0.0
    %316 = vmatpush1.msra.mxu0 0.0
    %317 = vmatprep.subr.mxu0 0.0
    %318 = vmatpush1.msra.mxu0 0.0
    %319 = vmatprep.subr.mxu0 0.0
    %320 = vmatpush1.msra.mxu0 0.0
    %321 = vmatprep.subr.mxu0 0.0
    %322 = vmatpush1.msra.mxu0 0.0
    %323 = vmatprep.subr.mxu0 0.0
    %324 = vmatpush1.msra.mxu0 0.0
    %325 = vmatprep.subr.mxu0 0.0
    %326 = vmatpush1.msra.mxu0 0.0
    %327 = vmatprep.subr.mxu0 0.0
    %328 = vmatpush1.msra.mxu0 0.0
    %329 = vmatprep.subr.mxu0 0.0
    %330 = vmatpush1.msra.mxu0 0.0
    %331 = vmatprep.subr.mxu0 0.0
    %332 = vmatpush1.msra.mxu0 0.0
    %333 = vmatprep.subr.mxu0 0.0
    %334 = vmatpush1.msra.mxu0 0.0
    %335 = vmatprep.subr.mxu0 0.0
    %336 = vmatpush1.msra.mxu0 0.0
    %337 = vmatprep.subr.mxu0 0.0
    %338 = vmatpush1.msra.mxu0 0.0
    %339 = vmatprep.subr.mxu0 0.0
    %340 = vmatpush1.msra.mxu0 0.0
    %341 = vmatprep.subr.mxu0 0.0
    %342 = vmatpush1.msra.mxu0 0.0
    %343 = vmatprep.subr.mxu0 0.0
    %344 = vmatpush1.msra.mxu0 0.0
    %345 = vmatprep.subr.mxu0 0.0
    %346 = vmatpush1.msra.mxu0 0.0
    %347 = vmatprep.subr.mxu0 0.0
    %348 = vmatpush1.msra.mxu0 0.0
    %349 = vmatprep.subr.mxu0 0.0
    %350 = vmatpush1.msra.mxu0 0.0
    %351 = vmatprep.subr.mxu0 0.0
    %352 = vmatpush1.msra.mxu0 0.0
    %353 = vmatprep.subr.mxu0 0.0
    %354 = vmatpush1.msra.mxu0 0.0
    %355 = vmatprep.subr.mxu0 0.0
    %356 = vmatpush1.msra.mxu0 0.0
    %357 = vmatprep.subr.mxu0 0.0
    %358 = vmatpush1.msra.mxu0 0.0
    %359 = vmatprep.subr.mxu0 0.0
    %360 = vmatpush1.msra.mxu0 0.0
    %361 = vmatprep.subr.mxu0 0.0
    %362 = vmatpush1.msra.mxu0 0.0
    %363 = vmatprep.subr.mxu0 0.0
    %364 = vmatpush1.msra.mxu0 0.0
    %365 = vmatprep.subr.mxu0 0.0
    %366 = vmatpush1.msra.mxu0 0.0
    %367 = vmatprep.subr.mxu0 0.0
    %368 = vmatpush1.msra.mxu0 0.0
    %369 = vmatprep.subr.mxu0 0.0
    %370 = vmatpush1.msra.mxu0 0.0
    %371 = vmatprep.mubr.f32.mxu0 0.0
    %372 = vmatmul.mubr.f32.gmra.mrb[0].mxu0 %v302
    %v373 = vpop.f32.mrb[0].mxu0
    %v374 = vadd.f32 0.0, %v373
    %v375 = vpop.f32.mrb[0].mxu0
    %376 = vmatprep.mubr.f32.mxu0 0.0
    %377 = vmatmul.mubr.f32.gmra.mrb[0].mxu0 %v305
    %v378 = vpop.f32.mrb[0].mxu0
    %v379 = vadd.f32 0.0, %v378
    %v380 = vpop.f32.mrb[0].mxu0
    %381 = vdwg.mxu0
    %382 = vrot.lane.b32.xlu0 %v170, 120
    %v383 = vpop.permute.xlu0 %382
    %384 = vrot.lane.b32.xlu0 %v175, 120
    %v385 = vpop.permute.xlu0 %384
    %386 = vrot.lane.b32.xlu0 %v170, 88
    %v387 = vpop.permute.xlu0 %386
    %388 = vrot.lane.b32.xlu0 %v175, 88
    %v389 = vpop.permute.xlu0 %388
    %v390 = vsel %vm184, %v383, 0
    %v392 = vsel %vm184, %v385, 0
    %v394 = vsel %vm184, %v387, 0
    %v396 = vsel %vm184, %v389, 0
    %398 = vmatprep.subr.mxu0 0.0
    %399 = vmatpush1.xpose.msra.mxu0 %v394
    %400 = vmatprep.subr.mxu0 0.0
    %401 = vmatpush1.xpose.msra.mxu0 %v396
    %402 = vmatprep.subr.mxu0 0.0
    %403 = vmatpush1.xpose.msra.mxu0 0.0
    %404 = vmatprep.subr.mxu0 0.0
    %405 = vmatpush1.xpose.msra.mxu0 0.0
    %406 = vmatprep.subr.mxu0 0.0
    %407 = vmatpush1.xpose.msra.mxu0 0.0
    %408 = vmatprep.subr.mxu0 0.0
    %409 = vmatpush1.xpose.msra.mxu0 0.0
    %410 = vmatprep.subr.mxu0 0.0
    %411 = vmatpush1.xpose.msra.mxu0 0.0
    %412 = vmatprep.subr.mxu0 0.0
    %413 = vmatpush1.xpose.msra.mxu0 0.0
    %414 = vmatprep.subr.mxu0 0.0
    %415 = vmatpush1.xpose.msra.mxu0 0.0
    %416 = vmatprep.subr.mxu0 0.0
    %417 = vmatpush1.xpose.msra.mxu0 0.0
    %418 = vmatprep.subr.mxu0 0.0
    %419 = vmatpush1.xpose.msra.mxu0 0.0
    %420 = vmatprep.subr.mxu0 0.0
    %421 = vmatpush1.xpose.msra.mxu0 0.0
    %422 = vmatprep.subr.mxu0 0.0
    %423 = vmatpush1.xpose.msra.mxu0 0.0
    %424 = vmatprep.subr.mxu0 0.0
    %425 = vmatpush1.xpose.msra.mxu0 0.0
    %426 = vmatprep.subr.mxu0 0.0
    %427 = vmatpush1.xpose.msra.mxu0 0.0
    %428 = vmatprep.subr.mxu0 0.0
    %429 = vmatpush1.xpose.msra.mxu0 0.0
    %430 = vmatprep.subr.mxu0 0.0
    %431 = vmatpush1.xpose.msra.mxu0 0.0
    %432 = vmatprep.subr.mxu0 0.0
    %433 = vmatpush1.xpose.msra.mxu0 0.0
    %434 = vmatprep.subr.mxu0 0.0
    %435 = vmatpush1.xpose.msra.mxu0 0.0
    %436 = vmatprep.subr.mxu0 0.0
    %437 = vmatpush1.xpose.msra.mxu0 0.0
    %438 = vmatprep.subr.mxu0 0.0
    %439 = vmatpush1.xpose.msra.mxu0 0.0
    %440 = vmatprep.subr.mxu0 0.0
    %441 = vmatpush1.xpose.msra.mxu0 0.0
    %442 = vmatprep.subr.mxu0 0.0
    %443 = vmatpush1.xpose.msra.mxu0 0.0
    %444 = vmatprep.subr.mxu0 0.0
    %445 = vmatpush1.xpose.msra.mxu0 0.0
    %446 = vmatprep.subr.mxu0 0.0
    %447 = vmatpush1.xpose.msra.mxu0 0.0
    %448 = vmatprep.subr.mxu0 0.0
    %449 = vmatpush1.xpose.msra.mxu0 0.0
    %450 = vmatprep.subr.mxu0 0.0
    %451 = vmatpush1.xpose.msra.mxu0 0.0
    %452 = vmatprep.subr.mxu0 0.0
    %453 = vmatpush1.xpose.msra.mxu0 0.0
    %454 = vmatprep.subr.mxu0 0.0
    %455 = vmatpush1.xpose.msra.mxu0 0.0
    %456 = vmatprep.subr.mxu0 0.0
    %457 = vmatpush1.xpose.msra.mxu0 0.0
    %458 = vmatprep.subr.mxu0 0.0
    %459 = vmatpush1.xpose.msra.mxu0 0.0
    %460 = vmatprep.subr.mxu0 0.0
    %461 = vmatpush1.xpose.msra.mxu0 0.0
    %462 = vmatprep.mubr.f32.mxu0 0.0
    %463 = vmatmul.mubr.f32.gmra.mrb[0].mxu0 %v390
    %v464 = vpop.f32.mrb[0].mxu0
    %v465 = vadd.f32 0.0, %v464
    %v466 = vpop.f32.mrb[0].mxu0
    %467 = vmatprep.mubr.f32.mxu0 0.0
    %468 = vmatmul.mubr.f32.gmra.mrb[0].mxu0 %v392
    %v469 = vpop.f32.mrb[0].mxu0
    %v470 = vadd.f32 0.0, %v469
    %v471 = vpop.f32.mrb[0].mxu0
    %472 = vdwg.mxu0
    %v473 = vmul.f32 %v465, 0.35355338
    %v474 = vmul.f32 %v470, 0.35355338
    %v475 = vadd.f32 %v473, %v90
    %v476 = vadd.f32 %v474, %v91
    %v477 = vsel %vm272, %v475, -inf
    %478 = vmax.xlane.f32.xlu0 %v477
    %v479 = vpop.xlane.xlu0 %478
    %v480 = vsel %vm272, %v476, -inf
    %481 = vmax.xlane.f32.xlu0 %v480
    %v482 = vpop.xlane.xlu0 %481
    %v483 = vsub.f32 %v475, %v479
    %v484 = vsub.f32 %v476, %v482
    %v485 = vmul.f32 %v483, 1.442695
    %v486 = vpow.pop %v485
    %v487 = vmul.f32 %v484, 1.442695
    %v488 = vpow.pop %v487
    %v489 = vsel %vm272, %v486, 0.0
    %490 = vadd.xlane.f32.xlu0 %v489
    %v491 = vpop.xlane.xlu0 %490
    %v492 = vsel %vm272, %v488, 0.0
    %493 = vadd.xlane.f32.xlu0 %v492
    %v494 = vpop.xlane.xlu0 %493
    %v495 = vrcp.pop %v491
    %v496 = vmul.f32 %v486, %v495
    %v497 = vrcp.pop %v494
    %v498 = vmul.f32 %v488, %v497
    %499 = vrot.lane.b32.xlu0 %v170, 56
    %v500 = vpop.permute.xlu0 %499
    %501 = vrot.lane.b32.xlu0 %v175, 56
    %v502 = vpop.permute.xlu0 %501
    %v506 = vsel %vm272, %v496, 0
    %v509 = vsel %vm272, %v498, 0
    %511 = vmatprep.subr.mxu0 0.0
    %512 = vmatpush1.msra.mxu0 %v500
    %513 = vmatprep.subr.mxu0 0.0
    %514 = vmatpush1.msra.mxu0 %v502
    %515 = vmatprep.subr.mxu0 0.0
    %516 = vmatpush1.msra.mxu0 0.0
    %517 = vmatprep.subr.mxu0 0.0
    %518 = vmatpush1.msra.mxu0 0.0
    %519 = vmatprep.subr.mxu0 0.0
    %520 = vmatpush1.msra.mxu0 0.0
    %521 = vmatprep.subr.mxu0 0.0
    %522 = vmatpush1.msra.mxu0 0.0
    %523 = vmatprep.subr.mxu0 0.0
    %524 = vmatpush1.msra.mxu0 0.0
    %525 = vmatprep.subr.mxu0 0.0
    %526 = vmatpush1.msra.mxu0 0.0
    %527 = vmatprep.subr.mxu0 0.0
    %528 = vmatpush1.msra.mxu0 0.0
    %529 = vmatprep.subr.mxu0 0.0
    %530 = vmatpush1.msra.mxu0 0.0
    %531 = vmatprep.subr.mxu0 0.0
    %532 = vmatpush1.msra.mxu0 0.0
    %533 = vmatprep.subr.mxu0 0.0
    %534 = vmatpush1.msra.mxu0 0.0
    %535 = vmatprep.subr.mxu0 0.0
    %536 = vmatpush1.msra.mxu0 0.0
    %537 = vmatprep.subr.mxu0 0.0
    %538 = vmatpush1.msra.mxu0 0.0
    %539 = vmatprep.subr.mxu0 0.0
    %540 = vmatpush1.msra.mxu0 0.0
    %541 = vmatprep.subr.mxu0 0.0
    %542 = vmatpush1.msra.mxu0 0.0
    %543 = vmatprep.subr.mxu0 0.0
    %544 = vmatpush1.msra.mxu0 0.0
    %545 = vmatprep.subr.mxu0 0.0
    %546 = vmatpush1.msra.mxu0 0.0
    %547 = vmatprep.subr.mxu0 0.0
    %548 = vmatpush1.msra.mxu0 0.0
    %549 = vmatprep.subr.mxu0 0.0
    %550 = vmatpush1.msra.mxu0 0.0
    %551 = vmatprep.subr.mxu0 0.0
    %552 = vmatpush1.msra.mxu0 0.0
    %553 = vmatprep.subr.mxu0 0.0
    %554 = vmatpush1.msra.mxu0 0.0
    %555 = vmatprep.subr.mxu0 0.0
    %556 = vmatpush1.msra.mxu0 0.0
    %557 = vmatprep.subr.mxu0 0.0
    %558 = vmatpush1.msra.mxu0 0.0
    %559 = vmatprep.subr.mxu0 0.0
    %560 = vmatpush1.msra.mxu0 0.0
    %561 = vmatprep.subr.mxu0 0.0
    %562 = vmatpush1.msra.mxu0 0.0
    %563 = vmatprep.subr.mxu0 0.0
    %564 = vmatpush1.msra.mxu0 0.0
    %565 = vmatprep.subr.mxu0 0.0
    %566 = vmatpush1.msra.mxu0 0.0
    %567 = vmatprep.subr.mxu0 0.0
    %568 = vmatpush1.msra.mxu0 0.0
    %569 = vmatprep.subr.mxu0 0.0
    %570 = vmatpush1.msra.mxu0 0.0
    %571 = vmatprep.subr.mxu0 0.0
    %572 = vmatpush1.msra.mxu0 0.0
    %573 = vmatprep.subr.mxu0 0.0
    %574 = vmatpush1.msra.mxu0 0.0
    %575 = vmatprep.mubr.f32.mxu0 0.0
    %576 = vmatmul.mubr.f32.gmra.mrb[0].mxu0 %v506
    %v577 = vpop.f32.mrb[0].mxu0
    %v578 = vadd.f32 0.0, %v577
    %v579 = vpop.f32.mrb[0].mxu0
    %580 = vmatprep.mubr.f32.mxu0 0.0
    %581 = vmatmul.mubr.f32.gmra.mrb[0].mxu0 %v509
    %v582 = vpop.f32.mrb[0].mxu0
    %v583 = vadd.f32 0.0, %v582
    %v584 = vpop.f32.mrb[0].mxu0
    %585 = vdwg.mxu0
    %586 = vrot.lane.b32.xlu0 %v170, 112
    %v587 = vpop.permute.xlu0 %586
    %588 = vrot.lane.b32.xlu0 %v175, 112
    %v589 = vpop.permute.xlu0 %588
    %590 = vrot.lane.b32.xlu0 %v170, 80
    %v591 = vpop.permute.xlu0 %590
    %592 = vrot.lane.b32.xlu0 %v175, 80
    %v593 = vpop.permute.xlu0 %592
    %v594 = vsel %vm184, %v587, 0
    %v596 = vsel %vm184, %v589, 0
    %v598 = vsel %vm184, %v591, 0
    %v600 = vsel %vm184, %v593, 0
    %602 = vmatprep.subr.mxu0 0.0
    %603 = vmatpush1.xpose.msra.mxu0 %v598
    %604 = vmatprep.subr.mxu0 0.0
    %605 = vmatpush1.xpose.msra.mxu0 %v600
    %606 = vmatprep.subr.mxu0 0.0
    %607 = vmatpush1.xpose.msra.mxu0 0.0
    %608 = vmatprep.subr.mxu0 0.0
    %609 = vmatpush1.xpose.msra.mxu0 0.0
    %610 = vmatprep.subr.mxu0 0.0
    %611 = vmatpush1.xpose.msra.mxu0 0.0
    %612 = vmatprep.subr.mxu0 0.0
    %613 = vmatpush1.xpose.msra.mxu0 0.0
    %614 = vmatprep.subr.mxu0 0.0
    %615 = vmatpush1.xpose.msra.mxu0 0.0
    %616 = vmatprep.subr.mxu0 0.0
    %617 = vmatpush1.xpose.msra.mxu0 0.0
    %618 = vmatprep.subr.mxu0 0.0
    %619 = vmatpush1.xpose.msra.mxu0 0.0
    %620 = vmatprep.subr.mxu0 0.0
    %621 = vmatpush1.xpose.msra.mxu0 0.0
    %622 = vmatprep.subr.mxu0 0.0
    %623 = vmatpush1.xpose.msra.mxu0 0.0
    %624 = vmatprep.subr.mxu0 0.0
    %625 = vmatpush1.xpose.msra.mxu0 0.0
    %626 = vmatprep.subr.mxu0 0.0
    %627 = vmatpush1.xpose.msra.mxu0 0.0
    %628 = vmatprep.subr.mxu0 0.0
    %629 = vmatpush1.xpose.msra.mxu0 0.0
    %630 = vmatprep.subr.mxu0 0.0
    %631 = vmatpush1.xpose.msra.mxu0 0.0
    %632 = vmatprep.subr.mxu0 0.0
    %633 = vmatpush1.xpose.msra.mxu0 0.0
    %634 = vmatprep.subr.mxu0 0.0
    %635 = vmatpush1.xpose.msra.mxu0 0.0
    %636 = vmatprep.subr.mxu0 0.0
    %637 = vmatpush1.xpose.msra.mxu0 0.0
    %638 = vmatprep.subr.mxu0 0.0
    %639 = vmatpush1.xpose.msra.mxu0 0.0
    %640 = vmatprep.subr.mxu0 0.0
    %641 = vmatpush1.xpose.msra.mxu0 0.0
    %642 = vmatprep.subr.mxu0 0.0
    %643 = vmatpush1.xpose.msra.mxu0 0.0
    %644 = vmatprep.subr.mxu0 0.0
    %645 = vmatpush1.xpose.msra.mxu0 0.0
    %646 = vmatprep.subr.mxu0 0.0
    %647 = vmatpush1.xpose.msra.mxu0 0.0
    %648 = vmatprep.subr.mxu0 0.0
    %649 = vmatpush1.xpose.msra.mxu0 0.0
    %650 = vmatprep.subr.mxu0 0.0
    %651 = vmatpush1.xpose.msra.mxu0 0.0
    %652 = vmatprep.subr.mxu0 0.0
    %653 = vmatpush1.xpose.msra.mxu0 0.0
    %654 = vmatprep.subr.mxu0 0.0
    %655 = vmatpush1.xpose.msra.mxu0 0.0
    %656 = vmatprep.subr.mxu0 0.0
    %657 = vmatpush1.xpose.msra.mxu0 0.0
    %658 = vmatprep.subr.mxu0 0.0
    %659 = vmatpush1.xpose.msra.mxu0 0.0
    %660 = vmatprep.subr.mxu0 0.0
    %661 = vmatpush1.xpose.msra.mxu0 0.0
    %662 = vmatprep.subr.mxu0 0.0
    %663 = vmatpush1.xpose.msra.mxu0 0.0
    %664 = vmatprep.subr.mxu0 0.0
    %665 = vmatpush1.xpose.msra.mxu0 0.0
    %666 = vmatprep.mubr.f32.mxu0 0.0
    %667 = vmatmul.mubr.f32.gmra.mrb[0].mxu0 %v594
    %v668 = vpop.f32.mrb[0].mxu0
    %v669 = vadd.f32 0.0, %v668
    %v670 = vpop.f32.mrb[0].mxu0
    %671 = vmatprep.mubr.f32.mxu0 0.0
    %672 = vmatmul.mubr.f32.gmra.mrb[0].mxu0 %v596
    %v673 = vpop.f32.mrb[0].mxu0
    %v674 = vadd.f32 0.0, %v673
    %v675 = vpop.f32.mrb[0].mxu0
    %676 = vdwg.mxu0
    %v677 = vmul.f32 %v669, 0.35355338
    %v678 = vmul.f32 %v674, 0.35355338
    %v679 = vadd.f32 %v677, %v90
    %v680 = vadd.f32 %v678, %v91
    %v681 = vsel %vm272, %v679, -inf
    %682 = vmax.xlane.f32.xlu0 %v681
    %v683 = vpop.xlane.xlu0 %682
    %v684 = vsel %vm272, %v680, -inf
    %685 = vmax.xlane.f32.xlu0 %v684
    %v686 = vpop.xlane.xlu0 %685
    %v687 = vsub.f32 %v679, %v683
    %v688 = vsub.f32 %v680, %v686
    %v689 = vmul.f32 %v687, 1.442695
    %v690 = vpow.pop %v689
    %v691 = vmul.f32 %v688, 1.442695
    %v692 = vpow.pop %v691
    %v693 = vsel %vm272, %v690, 0.0
    %694 = vadd.xlane.f32.xlu0 %v693
    %v695 = vpop.xlane.xlu0 %694
    %v696 = vsel %vm272, %v692, 0.0
    %697 = vadd.xlane.f32.xlu0 %v696
    %v698 = vpop.xlane.xlu0 %697
    %v699 = vrcp.pop %v695
    %v700 = vmul.f32 %v690, %v699
    %v701 = vrcp.pop %v698
    %v702 = vmul.f32 %v692, %v701
    %703 = vrot.lane.b32.xlu0 %v170, 48
    %v704 = vpop.permute.xlu0 %703
    %705 = vrot.lane.b32.xlu0 %v175, 48
    %v706 = vpop.permute.xlu0 %705
    %v710 = vsel %vm272, %v700, 0
    %v713 = vsel %vm272, %v702, 0
    %715 = vmatprep.subr.mxu0 0.0
    %716 = vmatpush1.msra.mxu0 %v704
    %717 = vmatprep.subr.mxu0 0.0
    %718 = vmatpush1.msra.mxu0 %v706
    %719 = vmatprep.subr.mxu0 0.0
    %720 = vmatpush1.msra.mxu0 0.0
    %721 = vmatprep.subr.mxu0 0.0
    %722 = vmatpush1.msra.mxu0 0.0
    %723 = vmatprep.subr.mxu0 0.0
    %724 = vmatpush1.msra.mxu0 0.0
    %725 = vmatprep.subr.mxu0 0.0
    %726 = vmatpush1.msra.mxu0 0.0
    %727 = vmatprep.subr.mxu0 0.0
    %728 = vmatpush1.msra.mxu0 0.0
    %729 = vmatprep.subr.mxu0 0.0
    %730 = vmatpush1.msra.mxu0 0.0
    %731 = vmatprep.subr.mxu0 0.0
    %732 = vmatpush1.msra.mxu0 0.0
    %733 = vmatprep.subr.mxu0 0.0
    %734 = vmatpush1.msra.mxu0 0.0
    %735 = vmatprep.subr.mxu0 0.0
    %736 = vmatpush1.msra.mxu0 0.0
    %737 = vmatprep.subr.mxu0 0.0
    %738 = vmatpush1.msra.mxu0 0.0
    %739 = vmatprep.subr.mxu0 0.0
    %740 = vmatpush1.msra.mxu0 0.0
    %741 = vmatprep.subr.mxu0 0.0
    %742 = vmatpush1.msra.mxu0 0.0
    %743 = vmatprep.subr.mxu0 0.0
    %744 = vmatpush1.msra.mxu0 0.0
    %745 = vmatprep.subr.mxu0 0.0
    %746 = vmatpush1.msra.mxu0 0.0
    %747 = vmatprep.subr.mxu0 0.0
    %748 = vmatpush1.msra.mxu0 0.0
    %749 = vmatprep.subr.mxu0 0.0
    %750 = vmatpush1.msra.mxu0 0.0
    %751 = vmatprep.subr.mxu0 0.0
    %752 = vmatpush1.msra.mxu0 0.0
    %753 = vmatprep.subr.mxu0 0.0
    %754 = vmatpush1.msra.mxu0 0.0
    %755 = vmatprep.subr.mxu0 0.0
    %756 = vmatpush1.msra.mxu0 0.0
    %757 = vmatprep.subr.mxu0 0.0
    %758 = vmatpush1.msra.mxu0 0.0
    %759 = vmatprep.subr.mxu0 0.0
    %760 = vmatpush1.msra.mxu0 0.0
    %761 = vmatprep.subr.mxu0 0.0
    %762 = vmatpush1.msra.mxu0 0.0
    %763 = vmatprep.subr.mxu0 0.0
    %764 = vmatpush1.msra.mxu0 0.0
    %765 = vmatprep.subr.mxu0 0.0
    %766 = vmatpush1.msra.mxu0 0.0
    %767 = vmatprep.subr.mxu0 0.0
    %768 = vmatpush1.msra.mxu0 0.0
    %769 = vmatprep.subr.mxu0 0.0
    %770 = vmatpush1.msra.mxu0 0.0
    %771 = vmatprep.subr.mxu0 0.0
    %772 = vmatpush1.msra.mxu0 0.0
    %773 = vmatprep.subr.mxu0 0.0
    %774 = vmatpush1.msra.mxu0 0.0
    %775 = vmatprep.subr.mxu0 0.0
    %776 = vmatpush1.msra.mxu0 0.0
    %777 = vmatprep.subr.mxu0 0.0
    %778 = vmatpush1.msra.mxu0 0.0
    %779 = vmatprep.mubr.f32.mxu0 0.0
    %780 = vmatmul.mubr.f32.gmra.mrb[0].mxu0 %v710
    %v781 = vpop.f32.mrb[0].mxu0
    %v782 = vadd.f32 0.0, %v781
    %v783 = vpop.f32.mrb[0].mxu0
    %784 = vmatprep.mubr.f32.mxu0 0.0
    %785 = vmatmul.mubr.f32.gmra.mrb[0].mxu0 %v713
    %v786 = vpop.f32.mrb[0].mxu0
    %v787 = vadd.f32 0.0, %v786
    %v788 = vpop.f32.mrb[0].mxu0
    %789 = vdwg.mxu0
    %790 = vrot.lane.b32.xlu0 %v170, 104
    %v791 = vpop.permute.xlu0 %790
    %792 = vrot.lane.b32.xlu0 %v175, 104
    %v793 = vpop.permute.xlu0 %792
    %794 = vrot.lane.b32.xlu0 %v170, 72
    %v795 = vpop.permute.xlu0 %794
    %796 = vrot.lane.b32.xlu0 %v175, 72
    %v797 = vpop.permute.xlu0 %796
    %v798 = vsel %vm184, %v791, 0
    %v800 = vsel %vm184, %v793, 0
    %v802 = vsel %vm184, %v795, 0
    %v804 = vsel %vm184, %v797, 0
    %806 = vmatprep.subr.mxu0 0.0
    %807 = vmatpush1.xpose.msra.mxu0 %v802
    %808 = vmatprep.subr.mxu0 0.0
    %809 = vmatpush1.xpose.msra.mxu0 %v804
    %810 = vmatprep.subr.mxu0 0.0
    %811 = vmatpush1.xpose.msra.mxu0 0.0
    %812 = vmatprep.subr.mxu0 0.0
    %813 = vmatpush1.xpose.msra.mxu0 0.0
    %814 = vmatprep.subr.mxu0 0.0
    %815 = vmatpush1.xpose.msra.mxu0 0.0
    %816 = vmatprep.subr.mxu0 0.0
    %817 = vmatpush1.xpose.msra.mxu0 0.0
    %818 = vmatprep.subr.mxu0 0.0
    %819 = vmatpush1.xpose.msra.mxu0 0.0
    %820 = vmatprep.subr.mxu0 0.0
    %821 = vmatpush1.xpose.msra.mxu0 0.0
    %822 = vmatprep.subr.mxu0 0.0
    %823 = vmatpush1.xpose.msra.mxu0 0.0
    %824 = vmatprep.subr.mxu0 0.0
    %825 = vmatpush1.xpose.msra.mxu0 0.0
    %826 = vmatprep.subr.mxu0 0.0
    %827 = vmatpush1.xpose.msra.mxu0 0.0
    %828 = vmatprep.subr.mxu0 0.0
    %829 = vmatpush1.xpose.msra.mxu0 0.0
    %830 = vmatprep.subr.mxu0 0.0
    %831 = vmatpush1.xpose.msra.mxu0 0.0
    %832 = vmatprep.subr.mxu0 0.0
    %833 = vmatpush1.xpose.msra.mxu0 0.0
    %834 = vmatprep.subr.mxu0 0.0
    %835 = vmatpush1.xpose.msra.mxu0 0.0
    %836 = vmatprep.subr.mxu0 0.0
    %837 = vmatpush1.xpose.msra.mxu0 0.0
    %838 = vmatprep.subr.mxu0 0.0
    %839 = vmatpush1.xpose.msra.mxu0 0.0
    %840 = vmatprep.subr.mxu0 0.0
    %841 = vmatpush1.xpose.msra.mxu0 0.0
    %842 = vmatprep.subr.mxu0 0.0
    %843 = vmatpush1.xpose.msra.mxu0 0.0
    %844 = vmatprep.subr.mxu0 0.0
    %845 = vmatpush1.xpose.msra.mxu0 0.0
    %846 = vmatprep.subr.mxu0 0.0
    %847 = vmatpush1.xpose.msra.mxu0 0.0
    %848 = vmatprep.subr.mxu0 0.0
    %849 = vmatpush1.xpose.msra.mxu0 0.0
    %850 = vmatprep.subr.mxu0 0.0
    %851 = vmatpush1.xpose.msra.mxu0 0.0
    %852 = vmatprep.subr.mxu0 0.0
    %853 = vmatpush1.xpose.msra.mxu0 0.0
    %854 = vmatprep.subr.mxu0 0.0
    %855 = vmatpush1.xpose.msra.mxu0 0.0
    %856 = vmatprep.subr.mxu0 0.0
    %857 = vmatpush1.xpose.msra.mxu0 0.0
    %858 = vmatprep.subr.mxu0 0.0
    %859 = vmatpush1.xpose.msra.mxu0 0.0
    %860 = vmatprep.subr.mxu0 0.0
    %861 = vmatpush1.xpose.msra.mxu0 0.0
    %862 = vmatprep.subr.mxu0 0.0
    %863 = vmatpush1.xpose.msra.mxu0 0.0
    %864 = vmatprep.subr.mxu0 0.0
    %865 = vmatpush1.xpose.msra.mxu0 0.0
    %866 = vmatprep.subr.mxu0 0.0
    %867 = vmatpush1.xpose.msra.mxu0 0.0
    %868 = vmatprep.subr.mxu0 0.0
    %869 = vmatpush1.xpose.msra.mxu0 0.0
    %870 = vmatprep.mubr.f32.mxu0 0.0
    %871 = vmatmul.mubr.f32.gmra.mrb[0].mxu0 %v798
    %v872 = vpop.f32.mrb[0].mxu0
    %v873 = vadd.f32 0.0, %v872
    %v874 = vpop.f32.mrb[0].mxu0
    %875 = vmatprep.mubr.f32.mxu0 0.0
    %876 = vmatmul.mubr.f32.gmra.mrb[0].mxu0 %v800
    %v877 = vpop.f32.mrb[0].mxu0
    %v878 = vadd.f32 0.0, %v877
    %v879 = vpop.f32.mrb[0].mxu0
    %880 = vdwg.mxu0
    %v881 = vmul.f32 %v873, 0.35355338
    %v882 = vmul.f32 %v878, 0.35355338
    %v883 = vadd.f32 %v881, %v90
    %v884 = vadd.f32 %v882, %v91
    %v885 = vsel %vm272, %v883, -inf
    %886 = vmax.xlane.f32.xlu0 %v885
    %v887 = vpop.xlane.xlu0 %886
    %v888 = vsel %vm272, %v884, -inf
    %889 = vmax.xlane.f32.xlu0 %v888
    %v890 = vpop.xlane.xlu0 %889
    %v891 = vsub.f32 %v883, %v887
    %v892 = vsub.f32 %v884, %v890
    %v893 = vmul.f32 %v891, 1.442695
    %v894 = vpow.pop %v893
    %v895 = vmul.f32 %v892, 1.442695
    %v896 = vpow.pop %v895
    %v897 = vsel %vm272, %v894, 0.0
    %898 = vadd.xlane.f32.xlu0 %v897
    %v899 = vpop.xlane.xlu0 %898
    %v900 = vsel %vm272, %v896, 0.0
    %901 = vadd.xlane.f32.xlu0 %v900
    %v902 = vpop.xlane.xlu0 %901
    %v903 = vrcp.pop %v899
    %v904 = vmul.f32 %v894, %v903
    %v905 = vrcp.pop %v902
    %v906 = vmul.f32 %v896, %v905
    %907 = vrot.lane.b32.xlu0 %v170, 40
    %v908 = vpop.permute.xlu0 %907
    %909 = vrot.lane.b32.xlu0 %v175, 40
    %v910 = vpop.permute.xlu0 %909
    %v914 = vsel %vm272, %v904, 0
    %v917 = vsel %vm272, %v906, 0
    %919 = vmatprep.subr.mxu0 0.0
    %920 = vmatpush1.msra.mxu0 %v908
    %921 = vmatprep.subr.mxu0 0.0
    %922 = vmatpush1.msra.mxu0 %v910
    %923 = vmatprep.subr.mxu0 0.0
    %924 = vmatpush1.msra.mxu0 0.0
    %925 = vmatprep.subr.mxu0 0.0
    %926 = vmatpush1.msra.mxu0 0.0
    %927 = vmatprep.subr.mxu0 0.0
    %928 = vmatpush1.msra.mxu0 0.0
    %929 = vmatprep.subr.mxu0 0.0
    %930 = vmatpush1.msra.mxu0 0.0
    %931 = vmatprep.subr.mxu0 0.0
    %932 = vmatpush1.msra.mxu0 0.0
    %933 = vmatprep.subr.mxu0 0.0
    %934 = vmatpush1.msra.mxu0 0.0
    %935 = vmatprep.subr.mxu0 0.0
    %936 = vmatpush1.msra.mxu0 0.0
    %937 = vmatprep.subr.mxu0 0.0
    %938 = vmatpush1.msra.mxu0 0.0
    %939 = vmatprep.subr.mxu0 0.0
    %940 = vmatpush1.msra.mxu0 0.0
    %941 = vmatprep.subr.mxu0 0.0
    %942 = vmatpush1.msra.mxu0 0.0
    %943 = vmatprep.subr.mxu0 0.0
    %944 = vmatpush1.msra.mxu0 0.0
    %945 = vmatprep.subr.mxu0 0.0
    %946 = vmatpush1.msra.mxu0 0.0
    %947 = vmatprep.subr.mxu0 0.0
    %948 = vmatpush1.msra.mxu0 0.0
    %949 = vmatprep.subr.mxu0 0.0
    %950 = vmatpush1.msra.mxu0 0.0
    %951 = vmatprep.subr.mxu0 0.0
    %952 = vmatpush1.msra.mxu0 0.0
    %953 = vmatprep.subr.mxu0 0.0
    %954 = vmatpush1.msra.mxu0 0.0
    %955 = vmatprep.subr.mxu0 0.0
    %956 = vmatpush1.msra.mxu0 0.0
    %957 = vmatprep.subr.mxu0 0.0
    %958 = vmatpush1.msra.mxu0 0.0
    %959 = vmatprep.subr.mxu0 0.0
    %960 = vmatpush1.msra.mxu0 0.0
    %961 = vmatprep.subr.mxu0 0.0
    %962 = vmatpush1.msra.mxu0 0.0
    %963 = vmatprep.subr.mxu0 0.0
    %964 = vmatpush1.msra.mxu0 0.0
    %965 = vmatprep.subr.mxu0 0.0
    %966 = vmatpush1.msra.mxu0 0.0
    %967 = vmatprep.subr.mxu0 0.0
    %968 = vmatpush1.msra.mxu0 0.0
    %969 = vmatprep.subr.mxu0 0.0
    %970 = vmatpush1.msra.mxu0 0.0
    %971 = vmatprep.subr.mxu0 0.0
    %972 = vmatpush1.msra.mxu0 0.0
    %973 = vmatprep.subr.mxu0 0.0
    %974 = vmatpush1.msra.mxu0 0.0
    %975 = vmatprep.subr.mxu0 0.0
    %976 = vmatpush1.msra.mxu0 0.0
    %977 = vmatprep.subr.mxu0 0.0
    %978 = vmatpush1.msra.mxu0 0.0
    %979 = vmatprep.subr.mxu0 0.0
    %980 = vmatpush1.msra.mxu0 0.0
    %981 = vmatprep.subr.mxu0 0.0
    %982 = vmatpush1.msra.mxu0 0.0
    %983 = vmatprep.mubr.f32.mxu0 0.0
    %984 = vmatmul.mubr.f32.gmra.mrb[0].mxu0 %v914
    %v985 = vpop.f32.mrb[0].mxu0
    %v986 = vadd.f32 0.0, %v985
    %v987 = vpop.f32.mrb[0].mxu0
    %988 = vmatprep.mubr.f32.mxu0 0.0
    %989 = vmatmul.mubr.f32.gmra.mrb[0].mxu0 %v917
    %v990 = vpop.f32.mrb[0].mxu0
    %v991 = vadd.f32 0.0, %v990
    %v992 = vpop.f32.mrb[0].mxu0
    %993 = vdwg.mxu0
    %996 = vrot.lane.b32.xlu0 %v578, 8
    %v997 = vpop.permute.xlu0 %996
    %998 = vrot.lane.b32.xlu0 %v583, 8
    %v999 = vpop.permute.xlu0 %998
    %1004 = vrot.lane.b32.xlu0 %v782, 16
    %v1005 = vpop.permute.xlu0 %1004
    %1006 = vrot.lane.b32.xlu0 %v787, 16
    %v1007 = vpop.permute.xlu0 %1006
    %1012 = vrot.lane.b32.xlu0 %v986, 24
    %v1013 = vpop.permute.xlu0 %1012
    %1014 = vrot.lane.b32.xlu0 %v991, 24
    %v1015 = vpop.permute.xlu0 %1014
    %v1018 = vsel %vm184, %v374, %v997
    %v1019 = vsel %vm184, %v379, %v999
    %v1020 = vsel %vm272, %v1018, %v1005
    %v1021 = vsel %vm272, %v1019, %v1007
    %vm1022 = vcmask 195584
    %v1023 = vsel %vm1022, %v1020, %v1013
    %v1024 = vsel %vm1022, %v1021, %v1015
    %v1025 = vlaneseq
    %v1026 = vshrl.u32 %v1025, 7
    %v1027 = vsub.s32 1, %v1026
    %v1028 = vrot.slane %v45, %v1027
    %1033 = vrot.lane.b32.xlu0 %v25, 32
    %v1034 = vpop.permute.xlu0 %1033
    %1035 = vrot.lane.b32.xlu0 %v28, 32
    %v1036 = vpop.permute.xlu0 %1035
    %1037 = vrot.lane.b32.xlu0 %v31, 32
    %v1038 = vpop.permute.xlu0 %1037
    %1039 = vrot.lane.b32.xlu0 %v34, 32
    %v1040 = vpop.permute.xlu0 %1039
    %v1046 = vsel %vm96, %v1023, 0
    %v1049 = vsel %vm96, %v1024, 0
    %1051 = vmatprep.subr.mxu0 0.0
    %1052 = vmatpush1.msra.mxu0 %v1034
    %1053 = vmatprep.subr.mxu0 0.0
    %1054 = vmatpush1.msra.mxu0 %v1036
    %1055 = vmatprep.subr.mxu0 0.0
    %1056 = vmatpush1.msra.mxu0 %v1038
    %1057 = vmatprep.subr.mxu0 0.0
    %1058 = vmatpush1.msra.mxu0 %v1040
    %1059 = vmatprep.subr.mxu0 0.0
    %1060 = vmatpush1.msra.mxu0 0.0
    %1061 = vmatprep.subr.mxu0 0.0
    %1062 = vmatpush1.msra.mxu0 0.0
    %1063 = vmatprep.subr.mxu0 0.0
    %1064 = vmatpush1.msra.mxu0 0.0
    %1065 = vmatprep.subr.mxu0 0.0
    %1066 = vmatpush1.msra.mxu0 0.0
    %1067 = vmatprep.subr.mxu0 0.0
    %1068 = vmatpush1.msra.mxu0 0.0
    %1069 = vmatprep.subr.mxu0 0.0
    %1070 = vmatpush1.msra.mxu0 0.0
    %1071 = vmatprep.subr.mxu0 0.0
    %1072 = vmatpush1.msra.mxu0 0.0
    %1073 = vmatprep.subr.mxu0 0.0
    %1074 = vmatpush1.msra.mxu0 0.0
    %1075 = vmatprep.subr.mxu0 0.0
    %1076 = vmatpush1.msra.mxu0 0.0
    %1077 = vmatprep.subr.mxu0 0.0
    %1078 = vmatpush1.msra.mxu0 0.0
    %1079 = vmatprep.subr.mxu0 0.0
    %1080 = vmatpush1.msra.mxu0 0.0
    %1081 = vmatprep.subr.mxu0 0.0
    %1082 = vmatpush1.msra.mxu0 0.0
    %1083 = vmatprep.subr.mxu0 0.0
    %1084 = vmatpush1.msra.mxu0 0.0
    %1085 = vmatprep.subr.mxu0 0.0
    %1086 = vmatpush1.msra.mxu0 0.0
    %1087 = vmatprep.subr.mxu0 0.0
    %1088 = vmatpush1.msra.mxu0 0.0
    %1089 = vmatprep.subr.mxu0 0.0
    %1090 = vmatpush1.msra.mxu0 0.0
    %1091 = vmatprep.subr.mxu0 0.0
    %1092 = vmatpush1.msra.mxu0 0.0
    %1093 = vmatprep.subr.mxu0 0.0
    %1094 = vmatpush1.msra.mxu0 0.0
    %1095 = vmatprep.subr.mxu0 0.0
    %1096 = vmatpush1.msra.mxu0 0.0
    %1097 = vmatprep.subr.mxu0 0.0
    %1098 = vmatpush1.msra.mxu0 0.0
    %1099 = vmatprep.subr.mxu0 0.0
    %1100 = vmatpush1.msra.mxu0 0.0
    %1101 = vmatprep.subr.mxu0 0.0
    %1102 = vmatpush1.msra.mxu0 0.0
    %1103 = vmatprep.subr.mxu0 0.0
    %1104 = vmatpush1.msra.mxu0 0.0
    %1105 = vmatprep.subr.mxu0 0.0
    %1106 = vmatpush1.msra.mxu0 0.0
    %1107 = vmatprep.subr.mxu0 0.0
    %1108 = vmatpush1.msra.mxu0 0.0
    %1109 = vmatprep.subr.mxu0 0.0
    %1110 = vmatpush1.msra.mxu0 0.0
    %1111 = vmatprep.subr.mxu0 0.0
    %1112 = vmatpush1.msra.mxu0 0.0
    %1113 = vmatprep.subr.mxu0 0.0
    %1114 = vmatpush1.msra.mxu0 0.0
    %1115 = vmatprep.mubr.f32.mxu0 0.0
    %1116 = vmatmul.mubr.f32.gmra.mrb[0].mxu0 %v1046
    %v1117 = vpop.f32.mrb[0].mxu0
    %v1118 = vadd.f32 %v1028, %v1117
    %v1119 = vpop.f32.mrb[0].mxu0
    %1120 = vmatprep.mubr.f32.mxu0 0.0
    %1121 = vmatmul.mubr.f32.gmra.mrb[0].mxu0 %v1049
    %v1122 = vpop.f32.mrb[0].mxu0
    %v1123 = vadd.f32 %v1028, %v1122
    %v1124 = vpop.f32.mrb[0].mxu0
    %1125 = vdwg.mxu0
    %v1126 = vadd.f32 %v21, %v1118
    %v1127 = vadd.f32 %v22, %v1123
    %v1128 = vsel %vm96, %v1126, 0.0
    %1129 = vadd.xlane.f32.xlu0 %v1128
    %v1130 = vpop.xlane.xlu0 %1129
    %v1131 = vsel %vm96, %v1127, 0.0
    %1132 = vadd.xlane.f32.xlu0 %v1131
    %v1133 = vpop.xlane.xlu0 %1132
    %v1134 = vrcp.pop 32.0
    %v1135 = vmul.f32 %v1130, %v1134
    %v1136 = vmul.f32 %v1133, %v1134
    %v1137 = vsub.f32 %v1126, %v1135
    %v1138 = vsub.f32 %v1127, %v1136
    %v1139 = vmul.f32 %v1137, %v1137
    %v1140 = vmul.f32 %v1138, %v1138
    %v1141 = vsel %vm96, %v1139, 0.0
    %1142 = vadd.xlane.f32.xlu0 %v1141
    %v1143 = vpop.xlane.xlu0 %1142
    %v1144 = vsel %vm96, %v1140, 0.0
    %1145 = vadd.xlane.f32.xlu0 %v1144
    %v1146 = vpop.xlane.xlu0 %1145
    %v1147 = vmul.f32 %v1143, %v1134
    %v1148 = vmul.f32 %v1146, %v1134
    %v1149 = vadd.f32 %v1147, 1e-05
    %v1150 = vadd.f32 %v1148, 1e-05
    %v1151 = vrsqrt.pop %v1149
    %v1152 = vrsqrt.pop %v1150
    %v1153 = vmul.f32 %v1137, %v1151
    %v1154 = vmul.f32 %v1138, %v1152
    %v1155 = vlaneseq
    %v1156 = vshrl.u32 %v1155, 7
    %v1157 = vsub.s32 7, %v1156
    %v1158 = vrot.slane %v45, %v1157
    %v1159 = vmul.f32 %v1153, %v1158
    %v1160 = vmul.f32 %v1154, %v1158
    %v1161 = vlaneseq
    %v1162 = vshrl.u32 %v1161, 7
    %v1163 = vsub.s32 0, %v1162
    %v1164 = vrot.slane %v46, %v1163
    %v1165 = vadd.f32 %v1159, %v1164
    %v1166 = vadd.f32 %v1160, %v1164
    %v1167 = vlaneseq
    %v1168 = vshrl.u32 %v1167, 7
    %v1169 = vsub.s32 2, %v1168
    %v1170 = vrot.slane %v45, %v1169
    %v1172 = vsel %vm96, %v1165, 0
    %v1175 = vsel %vm96, %v1166, 0
    %1177 = vmatprep.subr.mxu0 0.0
    %1178 = vmatpush1.msra.mxu0 %v26
    %1179 = vmatprep.subr.mxu0 0.0
    %1180 = vmatpush1.msra.mxu0 %v29
    %1181 = vmatprep.subr.mxu0 0.0
    %1182 = vmatpush1.msra.mxu0 %v32
    %1183 = vmatprep.subr.mxu0 0.0
    %1184 = vmatpush1.msra.mxu0 %v35
    %1185 = vmatprep.subr.mxu0 0.0
    %1186 = vmatpush1.msra.mxu0 0.0
    %1187 = vmatprep.subr.mxu0 0.0
    %1188 = vmatpush1.msra.mxu0 0.0
    %1189 = vmatprep.subr.mxu0 0.0
    %1190 = vmatpush1.msra.mxu0 0.0
    %1191 = vmatprep.subr.mxu0 0.0
    %1192 = vmatpush1.msra.mxu0 0.0
    %1193 = vmatprep.subr.mxu0 0.0
    %1194 = vmatpush1.msra.mxu0 0.0
    %1195 = vmatprep.subr.mxu0 0.0
    %1196 = vmatpush1.msra.mxu0 0.0
    %1197 = vmatprep.subr.mxu0 0.0
    %1198 = vmatpush1.msra.mxu0 0.0
    %1199 = vmatprep.subr.mxu0 0.0
    %1200 = vmatpush1.msra.mxu0 0.0
    %1201 = vmatprep.subr.mxu0 0.0
    %1202 = vmatpush1.msra.mxu0 0.0
    %1203 = vmatprep.subr.mxu0 0.0
    %1204 = vmatpush1.msra.mxu0 0.0
    %1205 = vmatprep.subr.mxu0 0.0
    %1206 = vmatpush1.msra.mxu0 0.0
    %1207 = vmatprep.subr.mxu0 0.0
    %1208 = vmatpush1.msra.mxu0 0.0
    %1209 = vmatprep.subr.mxu0 0.0
    %1210 = vmatpush1.msra.mxu0 0.0
    %1211 = vmatprep.subr.mxu0 0.0
    %1212 = vmatpush1.msra.mxu0 0.0
    %1213 = vmatprep.subr.mxu0 0.0
    %1214 = vmatpush1.msra.mxu0 0.0
    %1215 = vmatprep.subr.mxu0 0.0
    %1216 = vmatpush1.msra.mxu0 0.0
    %1217 = vmatprep.subr.mxu0 0.0
    %1218 = vmatpush1.msra.mxu0 0.0
    %1219 = vmatprep.subr.mxu0 0.0
    %1220 = vmatpush1.msra.mxu0 0.0
    %1221 = vmatprep.subr.mxu0 0.0
    %1222 = vmatpush1.msra.mxu0 0.0
    %1223 = vmatprep.subr.mxu0 0.0
    %1224 = vmatpush1.msra.mxu0 0.0
    %1225 = vmatprep.subr.mxu0 0.0
    %1226 = vmatpush1.msra.mxu0 0.0
    %1227 = vmatprep.subr.mxu0 0.0
    %1228 = vmatpush1.msra.mxu0 0.0
    %1229 = vmatprep.subr.mxu0 0.0
    %1230 = vmatpush1.msra.mxu0 0.0
    %1231 = vmatprep.subr.mxu0 0.0
    %1232 = vmatpush1.msra.mxu0 0.0
    %1233 = vmatprep.subr.mxu0 0.0
    %1234 = vmatpush1.msra.mxu0 0.0
    %1235 = vmatprep.subr.mxu0 0.0
    %1236 = vmatpush1.msra.mxu0 0.0
    %1237 = vmatprep.subr.mxu0 0.0
    %1238 = vmatpush1.msra.mxu0 0.0
    %1239 = vmatprep.subr.mxu0 0.0
    %1240 = vmatpush1.msra.mxu0 0.0
    %1241 = vmatprep.mubr.f32.mxu0 0.0
    %1242 = vmatmul.mubr.f32.gmra.mrb[0].mxu0 %v1172
    %v1243 = vpop.f32.mrb[0].mxu0
    %v1244 = vadd.f32 %v1170, %v1243
    %v1245 = vpop.f32.mrb[0].mxu0
    %1246 = vmatprep.mubr.f32.mxu0 0.0
    %1247 = vmatmul.mubr.f32.gmra.mrb[0].mxu0 %v1175
    %v1248 = vpop.f32.mrb[0].mxu0
    %v1249 = vadd.f32 %v1170, %v1248
    %v1250 = vpop.f32.mrb[0].mxu0
    %1251 = vdwg.mxu0
    %v1252 = vlaneseq
    %v1253 = vshrl.u32 %v1252, 7
    %v1254 = vsub.s32 3, %v1253
    %v1255 = vrot.slane %v45, %v1254
    %1260 = vrot.lane.b32.xlu0 %v26, 96
    %v1261 = vpop.permute.xlu0 %1260
    %1262 = vrot.lane.b32.xlu0 %v29, 96
    %v1263 = vpop.permute.xlu0 %1262
    %1264 = vrot.lane.b32.xlu0 %v32, 96
    %v1265 = vpop.permute.xlu0 %1264
    %1266 = vrot.lane.b32.xlu0 %v35, 96
    %v1267 = vpop.permute.xlu0 %1266
    %v1273 = vsel %vm96, %v23, 0
    %v1276 = vsel %vm96, %v24, 0
    %1278 = vmatprep.subr.mxu0 0.0
    %1279 = vmatpush1.msra.mxu0 %v1261
    %1280 = vmatprep.subr.mxu0 0.0
    %1281 = vmatpush1.msra.mxu0 %v1263
    %1282 = vmatprep.subr.mxu0 0.0
    %1283 = vmatpush1.msra.mxu0 %v1265
    %1284 = vmatprep.subr.mxu0 0.0
    %1285 = vmatpush1.msra.mxu0 %v1267
    %1286 = vmatprep.subr.mxu0 0.0
    %1287 = vmatpush1.msra.mxu0 0.0
    %1288 = vmatprep.subr.mxu0 0.0
    %1289 = vmatpush1.msra.mxu0 0.0
    %1290 = vmatprep.subr.mxu0 0.0
    %1291 = vmatpush1.msra.mxu0 0.0
    %1292 = vmatprep.subr.mxu0 0.0
    %1293 = vmatpush1.msra.mxu0 0.0
    %1294 = vmatprep.subr.mxu0 0.0
    %1295 = vmatpush1.msra.mxu0 0.0
    %1296 = vmatprep.subr.mxu0 0.0
    %1297 = vmatpush1.msra.mxu0 0.0
    %1298 = vmatprep.subr.mxu0 0.0
    %1299 = vmatpush1.msra.mxu0 0.0
    %1300 = vmatprep.subr.mxu0 0.0
    %1301 = vmatpush1.msra.mxu0 0.0
    %1302 = vmatprep.subr.mxu0 0.0
    %1303 = vmatpush1.msra.mxu0 0.0
    %1304 = vmatprep.subr.mxu0 0.0
    %1305 = vmatpush1.msra.mxu0 0.0
    %1306 = vmatprep.subr.mxu0 0.0
    %1307 = vmatpush1.msra.mxu0 0.0
    %1308 = vmatprep.subr.mxu0 0.0
    %1309 = vmatpush1.msra.mxu0 0.0
    %1310 = vmatprep.subr.mxu0 0.0
    %1311 = vmatpush1.msra.mxu0 0.0
    %1312 = vmatprep.subr.mxu0 0.0
    %1313 = vmatpush1.msra.mxu0 0.0
    %1314 = vmatprep.subr.mxu0 0.0
    %1315 = vmatpush1.msra.mxu0 0.0
    %1316 = vmatprep.subr.mxu0 0.0
    %1317 = vmatpush1.msra.mxu0 0.0
    %1318 = vmatprep.subr.mxu0 0.0
    %1319 = vmatpush1.msra.mxu0 0.0
    %1320 = vmatprep.subr.mxu0 0.0
    %1321 = vmatpush1.msra.mxu0 0.0
    %1322 = vmatprep.subr.mxu0 0.0
    %1323 = vmatpush1.msra.mxu0 0.0
    %1324 = vmatprep.subr.mxu0 0.0
    %1325 = vmatpush1.msra.mxu0 0.0
    %1326 = vmatprep.subr.mxu0 0.0
    %1327 = vmatpush1.msra.mxu0 0.0
    %1328 = vmatprep.subr.mxu0 0.0
    %1329 = vmatpush1.msra.mxu0 0.0
    %1330 = vmatprep.subr.mxu0 0.0
    %1331 = vmatpush1.msra.mxu0 0.0
    %1332 = vmatprep.subr.mxu0 0.0
    %1333 = vmatpush1.msra.mxu0 0.0
    %1334 = vmatprep.subr.mxu0 0.0
    %1335 = vmatpush1.msra.mxu0 0.0
    %1336 = vmatprep.subr.mxu0 0.0
    %1337 = vmatpush1.msra.mxu0 0.0
    %1338 = vmatprep.subr.mxu0 0.0
    %1339 = vmatpush1.msra.mxu0 0.0
    %1340 = vmatprep.subr.mxu0 0.0
    %1341 = vmatpush1.msra.mxu0 0.0
    %1342 = vmatprep.mubr.f32.mxu0 0.0
    %1343 = vmatmul.mubr.f32.gmra.mrb[0].mxu0 %v1273
    %v1344 = vpop.f32.mrb[0].mxu0
    %v1345 = vadd.f32 %v1255, %v1344
    %v1346 = vpop.f32.mrb[0].mxu0
    %1347 = vmatprep.mubr.f32.mxu0 0.0
    %1348 = vmatmul.mubr.f32.gmra.mrb[0].mxu0 %v1276
    %v1349 = vpop.f32.mrb[0].mxu0
    %v1350 = vadd.f32 %v1255, %v1349
    %v1351 = vpop.f32.mrb[0].mxu0
    %1352 = vdwg.mxu0
    %v1354 = vsel %vm184, %v1244, 0
    %v1357 = vsel %vm184, %v1249, 0
    %v1360 = vsel %vm184, %v1345, 0
    %v1363 = vsel %vm184, %v1350, 0
    %1365 = vmatprep.subr.mxu0 0.0
    %1366 = vmatpush1.xpose.msra.mxu0 %v1360
    %1367 = vmatprep.subr.mxu0 0.0
    %1368 = vmatpush1.xpose.msra.mxu0 %v1363
    %1369 = vmatprep.subr.mxu0 0.0
    %1370 = vmatpush1.xpose.msra.mxu0 0.0
    %1371 = vmatprep.subr.mxu0 0.0
    %1372 = vmatpush1.xpose.msra.mxu0 0.0
    %1373 = vmatprep.subr.mxu0 0.0
    %1374 = vmatpush1.xpose.msra.mxu0 0.0
    %1375 = vmatprep.subr.mxu0 0.0
    %1376 = vmatpush1.xpose.msra.mxu0 0.0
    %1377 = vmatprep.subr.mxu0 0.0
    %1378 = vmatpush1.xpose.msra.mxu0 0.0
    %1379 = vmatprep.subr.mxu0 0.0
    %1380 = vmatpush1.xpose.msra.mxu0 0.0
    %1381 = vmatprep.subr.mxu0 0.0
    %1382 = vmatpush1.xpose.msra.mxu0 0.0
    %1383 = vmatprep.subr.mxu0 0.0
    %1384 = vmatpush1.xpose.msra.mxu0 0.0
    %1385 = vmatprep.subr.mxu0 0.0
    %1386 = vmatpush1.xpose.msra.mxu0 0.0
    %1387 = vmatprep.subr.mxu0 0.0
    %1388 = vmatpush1.xpose.msra.mxu0 0.0
    %1389 = vmatprep.subr.mxu0 0.0
    %1390 = vmatpush1.xpose.msra.mxu0 0.0
    %1391 = vmatprep.subr.mxu0 0.0
    %1392 = vmatpush1.xpose.msra.mxu0 0.0
    %1393 = vmatprep.subr.mxu0 0.0
    %1394 = vmatpush1.xpose.msra.mxu0 0.0
    %1395 = vmatprep.subr.mxu0 0.0
    %1396 = vmatpush1.xpose.msra.mxu0 0.0
    %1397 = vmatprep.subr.mxu0 0.0
    %1398 = vmatpush1.xpose.msra.mxu0 0.0
    %1399 = vmatprep.subr.mxu0 0.0
    %1400 = vmatpush1.xpose.msra.mxu0 0.0
    %1401 = vmatprep.subr.mxu0 0.0
    %1402 = vmatpush1.xpose.msra.mxu0 0.0
    %1403 = vmatprep.subr.mxu0 0.0
    %1404 = vmatpush1.xpose.msra.mxu0 0.0
    %1405 = vmatprep.subr.mxu0 0.0
    %1406 = vmatpush1.xpose.msra.mxu0 0.0
    %1407 = vmatprep.subr.mxu0 0.0
    %1408 = vmatpush1.xpose.msra.mxu0 0.0
    %1409 = vmatprep.subr.mxu0 0.0
    %1410 = vmatpush1.xpose.msra.mxu0 0.0
    %1411 = vmatprep.subr.mxu0 0.0
    %1412 = vmatpush1.xpose.msra.mxu0 0.0
    %1413 = vmatprep.subr.mxu0 0.0
    %1414 = vmatpush1.xpose.msra.mxu0 0.0
    %1415 = vmatprep.subr.mxu0 0.0
    %1416 = vmatpush1.xpose.msra.mxu0 0.0
    %1417 = vmatprep.subr.mxu0 0.0
    %1418 = vmatpush1.xpose.msra.mxu0 0.0
    %1419 = vmatprep.subr.mxu0 0.0
    %1420 = vmatpush1.xpose.msra.mxu0 0.0
    %1421 = vmatprep.subr.mxu0 0.0
    %1422 = vmatpush1.xpose.msra.mxu0 0.0
    %1423 = vmatprep.subr.mxu0 0.0
    %1424 = vmatpush1.xpose.msra.mxu0 0.0
    %1425 = vmatprep.subr.mxu0 0.0
    %1426 = vmatpush1.xpose.msra.mxu0 0.0
    %1427 = vmatprep.subr.mxu0 0.0
    %1428 = vmatpush1.xpose.msra.mxu0 0.0
    %1429 = vmatprep.mubr.f32.mxu0 0.0
    %1430 = vmatmul.mubr.f32.gmra.mrb[0].mxu0 %v1354
    %v1431 = vpop.f32.mrb[0].mxu0
    %v1432 = vadd.f32 0.0, %v1431
    %v1433 = vpop.f32.mrb[0].mxu0
    %1434 = vmatprep.mubr.f32.mxu0 0.0
    %1435 = vmatmul.mubr.f32.gmra.mrb[0].mxu0 %v1357
    %v1436 = vpop.f32.mrb[0].mxu0
    %v1437 = vadd.f32 0.0, %v1436
    %v1438 = vpop.f32.mrb[0].mxu0
    %1439 = vdwg.mxu0
    %v1440 = vmul.f32 %v1432, 0.35355338
    %v1441 = vmul.f32 %v1437, 0.35355338
    %v1442 = vadd.f32 %v1440, %v90
    %v1443 = vadd.f32 %v1441, %v91
    %v1444 = vsel %vm272, %v1442, -inf
    %1445 = vmax.xlane.f32.xlu0 %v1444
    %v1446 = vpop.xlane.xlu0 %1445
    %v1447 = vsel %vm272, %v1443, -inf
    %1448 = vmax.xlane.f32.xlu0 %v1447
    %v1449 = vpop.xlane.xlu0 %1448
    %v1450 = vsub.f32 %v1442, %v1446
    %v1451 = vsub.f32 %v1443, %v1449
    %v1452 = vmul.f32 %v1450, 1.442695
    %v1453 = vpow.pop %v1452
    %v1454 = vmul.f32 %v1451, 1.442695
    %v1455 = vpow.pop %v1454
    %v1456 = vsel %vm272, %v1453, 0.0
    %1457 = vadd.xlane.f32.xlu0 %v1456
    %v1458 = vpop.xlane.xlu0 %1457
    %v1459 = vsel %vm272, %v1455, 0.0
    %1460 = vadd.xlane.f32.xlu0 %v1459
    %v1461 = vpop.xlane.xlu0 %1460
    %v1462 = vrcp.pop %v1458
    %v1463 = vmul.f32 %v1453, %v1462
    %v1464 = vrcp.pop %v1461
    %v1465 = vmul.f32 %v1455, %v1464
    %1466 = vrot.lane.b32.xlu0 %v1345, 96
    %v1467 = vpop.permute.xlu0 %1466
    %1468 = vrot.lane.b32.xlu0 %v1350, 96
    %v1469 = vpop.permute.xlu0 %1468
    %v1473 = vsel %vm272, %v1463, 0
    %v1476 = vsel %vm272, %v1465, 0
    %1478 = vmatprep.subr.mxu0 0.0
    %1479 = vmatpush1.msra.mxu0 %v1467
    %1480 = vmatprep.subr.mxu0 0.0
    %1481 = vmatpush1.msra.mxu0 %v1469
    %1482 = vmatprep.subr.mxu0 0.0
    %1483 = vmatpush1.msra.mxu0 0.0
    %1484 = vmatprep.subr.mxu0 0.0
    %1485 = vmatpush1.msra.mxu0 0.0
    %1486 = vmatprep.subr.mxu0 0.0
    %1487 = vmatpush1.msra.mxu0 0.0
    %1488 = vmatprep.subr.mxu0 0.0
    %1489 = vmatpush1.msra.mxu0 0.0
    %1490 = vmatprep.subr.mxu0 0.0
    %1491 = vmatpush1.msra.mxu0 0.0
    %1492 = vmatprep.subr.mxu0 0.0
    %1493 = vmatpush1.msra.mxu0 0.0
    %1494 = vmatprep.subr.mxu0 0.0
    %1495 = vmatpush1.msra.mxu0 0.0
    %1496 = vmatprep.subr.mxu0 0.0
    %1497 = vmatpush1.msra.mxu0 0.0
    %1498 = vmatprep.subr.mxu0 0.0
    %1499 = vmatpush1.msra.mxu0 0.0
    %1500 = vmatprep.subr.mxu0 0.0
    %1501 = vmatpush1.msra.mxu0 0.0
    %1502 = vmatprep.subr.mxu0 0.0
    %1503 = vmatpush1.msra.mxu0 0.0
    %1504 = vmatprep.subr.mxu0 0.0
    %1505 = vmatpush1.msra.mxu0 0.0
    %1506 = vmatprep.subr.mxu0 0.0
    %1507 = vmatpush1.msra.mxu0 0.0
    %1508 = vmatprep.subr.mxu0 0.0
    %1509 = vmatpush1.msra.mxu0 0.0
    %1510 = vmatprep.subr.mxu0 0.0
    %1511 = vmatpush1.msra.mxu0 0.0
    %1512 = vmatprep.subr.mxu0 0.0
    %1513 = vmatpush1.msra.mxu0 0.0
    %1514 = vmatprep.subr.mxu0 0.0
    %1515 = vmatpush1.msra.mxu0 0.0
    %1516 = vmatprep.subr.mxu0 0.0
    %1517 = vmatpush1.msra.mxu0 0.0
    %1518 = vmatprep.subr.mxu0 0.0
    %1519 = vmatpush1.msra.mxu0 0.0
    %1520 = vmatprep.subr.mxu0 0.0
    %1521 = vmatpush1.msra.mxu0 0.0
    %1522 = vmatprep.subr.mxu0 0.0
    %1523 = vmatpush1.msra.mxu0 0.0
    %1524 = vmatprep.subr.mxu0 0.0
    %1525 = vmatpush1.msra.mxu0 0.0
    %1526 = vmatprep.subr.mxu0 0.0
    %1527 = vmatpush1.msra.mxu0 0.0
    %1528 = vmatprep.subr.mxu0 0.0
    %1529 = vmatpush1.msra.mxu0 0.0
    %1530 = vmatprep.subr.mxu0 0.0
    %1531 = vmatpush1.msra.mxu0 0.0
    %1532 = vmatprep.subr.mxu0 0.0
    %1533 = vmatpush1.msra.mxu0 0.0
    %1534 = vmatprep.subr.mxu0 0.0
    %1535 = vmatpush1.msra.mxu0 0.0
    %1536 = vmatprep.subr.mxu0 0.0
    %1537 = vmatpush1.msra.mxu0 0.0
    %1538 = vmatprep.subr.mxu0 0.0
    %1539 = vmatpush1.msra.mxu0 0.0
    %1540 = vmatprep.subr.mxu0 0.0
    %1541 = vmatpush1.msra.mxu0 0.0
    %1542 = vmatprep.mubr.f32.mxu0 0.0
    %1543 = vmatmul.mubr.f32.gmra.mrb[0].mxu0 %v1473
    %v1544 = vpop.f32.mrb[0].mxu0
    %v1545 = vadd.f32 0.0, %v1544
    %v1546 = vpop.f32.mrb[0].mxu0
    %1547 = vmatprep.mubr.f32.mxu0 0.0
    %1548 = vmatmul.mubr.f32.gmra.mrb[0].mxu0 %v1476
    %v1549 = vpop.f32.mrb[0].mxu0
    %v1550 = vadd.f32 0.0, %v1549
    %v1551 = vpop.f32.mrb[0].mxu0
    %1552 = vdwg.mxu0
    %1553 = vrot.lane.b32.xlu0 %v1244, 120
    %v1554 = vpop.permute.xlu0 %1553
    %1555 = vrot.lane.b32.xlu0 %v1249, 120
    %v1556 = vpop.permute.xlu0 %1555
    %1557 = vrot.lane.b32.xlu0 %v1345, 120
    %v1558 = vpop.permute.xlu0 %1557
    %1559 = vrot.lane.b32.xlu0 %v1350, 120
    %v1560 = vpop.permute.xlu0 %1559
    %v1561 = vsel %vm184, %v1554, 0
    %v1563 = vsel %vm184, %v1556, 0
    %v1565 = vsel %vm184, %v1558, 0
    %v1567 = vsel %vm184, %v1560, 0
    %1569 = vmatprep.subr.mxu0 0.0
    %1570 = vmatpush1.xpose.msra.mxu0 %v1565
    %1571 = vmatprep.subr.mxu0 0.0
    %1572 = vmatpush1.xpose.msra.mxu0 %v1567
    %1573 = vmatprep.subr.mxu0 0.0
    %1574 = vmatpush1.xpose.msra.mxu0 0.0
    %1575 = vmatprep.subr.mxu0 0.0
    %1576 = vmatpush1.xpose.msra.mxu0 0.0
    %1577 = vmatprep.subr.mxu0 0.0
    %1578 = vmatpush1.xpose.msra.mxu0 0.0
    %1579 = vmatprep.subr.mxu0 0.0
    %1580 = vmatpush1.xpose.msra.mxu0 0.0
    %1581 = vmatprep.subr.mxu0 0.0
    %1582 = vmatpush1.xpose.msra.mxu0 0.0
    %1583 = vmatprep.subr.mxu0 0.0
    %1584 = vmatpush1.xpose.msra.mxu0 0.0
    %1585 = vmatprep.subr.mxu0 0.0
    %1586 = vmatpush1.xpose.msra.mxu0 0.0
    %1587 = vmatprep.subr.mxu0 0.0
    %1588 = vmatpush1.xpose.msra.mxu0 0.0
    %1589 = vmatprep.subr.mxu0 0.0
    %1590 = vmatpush1.xpose.msra.mxu0 0.0
    %1591 = vmatprep.subr.mxu0 0.0
    %1592 = vmatpush1.xpose.msra.mxu0 0.0
    %1593 = vmatprep.subr.mxu0 0.0
    %1594 = vmatpush1.xpose.msra.mxu0 0.0
    %1595 = vmatprep.subr.mxu0 0.0
    %1596 = vmatpush1.xpose.msra.mxu0 0.0
    %1597 = vmatprep.subr.mxu0 0.0
    %1598 = vmatpush1.xpose.msra.mxu0 0.0
    %1599 = vmatprep.subr.mxu0 0.0
    %1600 = vmatpush1.xpose.msra.mxu0 0.0
    %1601 = vmatprep.subr.mxu0 0.0
    %1602 = vmatpush1.xpose.msra.mxu0 0.0
    %1603 = vmatprep.subr.mxu0 0.0
    %1604 = vmatpush1.xpose.msra.mxu0 0.0
    %1605 = vmatprep.subr.mxu0 0.0
    %1606 = vmatpush1.xpose.msra.mxu0 0.0
    %1607 = vmatprep.subr.mxu0 0.0
    %1608 = vmatpush1.xpose.msra.mxu0 0.0
    %1609 = vmatprep.subr.mxu0 0.0
    %1610 = vmatpush1.xpose.msra.mxu0 0.0
    %1611 = vmatprep.subr.mxu0 0.0
    %1612 = vmatpush1.xpose.msra.mxu0 0.0
    %1613 = vmatprep.subr.mxu0 0.0
    %1614 = vmatpush1.xpose.msra.mxu0 0.0
    %1615 = vmatprep.subr.mxu0 0.0
    %1616 = vmatpush1.xpose.msra.mxu0 0.0
    %1617 = vmatprep.subr.mxu0 0.0
    %1618 = vmatpush1.xpose.msra.mxu0 0.0
    %1619 = vmatprep.subr.mxu0 0.0
    %1620 = vmatpush1.xpose.msra.mxu0 0.0
    %1621 = vmatprep.subr.mxu0 0.0
    %1622 = vmatpush1.xpose.msra.mxu0 0.0
    %1623 = vmatprep.subr.mxu0 0.0
    %1624 = vmatpush1.xpose.msra.mxu0 0.0
    %1625 = vmatprep.subr.mxu0 0.0
    %1626 = vmatpush1.xpose.msra.mxu0 0.0
    %1627 = vmatprep.subr.mxu0 0.0
    %1628 = vmatpush1.xpose.msra.mxu0 0.0
    %1629 = vmatprep.subr.mxu0 0.0
    %1630 = vmatpush1.xpose.msra.mxu0 0.0
    %1631 = vmatprep.subr.mxu0 0.0
    %1632 = vmatpush1.xpose.msra.mxu0 0.0
    %1633 = vmatprep.mubr.f32.mxu0 0.0
    %1634 = vmatmul.mubr.f32.gmra.mrb[0].mxu0 %v1561
    %v1635 = vpop.f32.mrb[0].mxu0
    %v1636 = vadd.f32 0.0, %v1635
    %v1637 = vpop.f32.mrb[0].mxu0
    %1638 = vmatprep.mubr.f32.mxu0 0.0
    %1639 = vmatmul.mubr.f32.gmra.mrb[0].mxu0 %v1563
    %v1640 = vpop.f32.mrb[0].mxu0
    %v1641 = vadd.f32 0.0, %v1640
    %v1642 = vpop.f32.mrb[0].mxu0
    %1643 = vdwg.mxu0
    %v1644 = vmul.f32 %v1636, 0.35355338
    %v1645 = vmul.f32 %v1641, 0.35355338
    %v1646 = vadd.f32 %v1644, %v90
    %v1647 = vadd.f32 %v1645, %v91
    %v1648 = vsel %vm272, %v1646, -inf
    %1649 = vmax.xlane.f32.xlu0 %v1648
    %v1650 = vpop.xlane.xlu0 %1649
    %v1651 = vsel %vm272, %v1647, -inf
    %1652 = vmax.xlane.f32.xlu0 %v1651
    %v1653 = vpop.xlane.xlu0 %1652
    %v1654 = vsub.f32 %v1646, %v1650
    %v1655 = vsub.f32 %v1647, %v1653
    %v1656 = vmul.f32 %v1654, 1.442695
    %v1657 = vpow.pop %v1656
    %v1658 = vmul.f32 %v1655, 1.442695
    %v1659 = vpow.pop %v1658
    %v1660 = vsel %vm272, %v1657, 0.0
    %1661 = vadd.xlane.f32.xlu0 %v1660
    %v1662 = vpop.xlane.xlu0 %1661
    %v1663 = vsel %vm272, %v1659, 0.0
    %1664 = vadd.xlane.f32.xlu0 %v1663
    %v1665 = vpop.xlane.xlu0 %1664
    %v1666 = vrcp.pop %v1662
    %v1667 = vmul.f32 %v1657, %v1666
    %v1668 = vrcp.pop %v1665
    %v1669 = vmul.f32 %v1659, %v1668
    %1670 = vrot.lane.b32.xlu0 %v1345, 88
    %v1671 = vpop.permute.xlu0 %1670
    %1672 = vrot.lane.b32.xlu0 %v1350, 88
    %v1673 = vpop.permute.xlu0 %1672
    %v1677 = vsel %vm272, %v1667, 0
    %v1680 = vsel %vm272, %v1669, 0
    %1682 = vmatprep.subr.mxu0 0.0
    %1683 = vmatpush1.msra.mxu0 %v1671
    %1684 = vmatprep.subr.mxu0 0.0
    %1685 = vmatpush1.msra.mxu0 %v1673
    %1686 = vmatprep.subr.mxu0 0.0
    %1687 = vmatpush1.msra.mxu0 0.0
    %1688 = vmatprep.subr.mxu0 0.0
    %1689 = vmatpush1.msra.mxu0 0.0
    %1690 = vmatprep.subr.mxu0 0.0
    %1691 = vmatpush1.msra.mxu0 0.0
    %1692 = vmatprep.subr.mxu0 0.0
    %1693 = vmatpush1.msra.mxu0 0.0
    %1694 = vmatprep.subr.mxu0 0.0
    %1695 = vmatpush1.msra.mxu0 0.0
    %1696 = vmatprep.subr.mxu0 0.0
    %1697 = vmatpush1.msra.mxu0 0.0
    %1698 = vmatprep.subr.mxu0 0.0
    %1699 = vmatpush1.msra.mxu0 0.0
    %1700 = vmatprep.subr.mxu0 0.0
    %1701 = vmatpush1.msra.mxu0 0.0
    %1702 = vmatprep.subr.mxu0 0.0
    %1703 = vmatpush1.msra.mxu0 0.0
    %1704 = vmatprep.subr.mxu0 0.0
    %1705 = vmatpush1.msra.mxu0 0.0
    %1706 = vmatprep.subr.mxu0 0.0
    %1707 = vmatpush1.msra.mxu0 0.0
    %1708 = vmatprep.subr.mxu0 0.0
    %1709 = vmatpush1.msra.mxu0 0.0
    %1710 = vmatprep.subr.mxu0 0.0
    %1711 = vmatpush1.msra.mxu0 0.0
    %1712 = vmatprep.subr.mxu0 0.0
    %1713 = vmatpush1.msra.mxu0 0.0
    %1714 = vmatprep.subr.mxu0 0.0
    %1715 = vmatpush1.msra.mxu0 0.0
    %1716 = vmatprep.subr.mxu0 0.0
    %1717 = vmatpush1.msra.mxu0 0.0
    %1718 = vmatprep.subr.mxu0 0.0
    %1719 = vmatpush1.msra.mxu0 0.0
    %1720 = vmatprep.subr.mxu0 0.0
    %1721 = vmatpush1.msra.mxu0 0.0
    %1722 = vmatprep.subr.mxu0 0.0
    %1723 = vmatpush1.msra.mxu0 0.0
    %1724 = vmatprep.subr.mxu0 0.0
    %1725 = vmatpush1.msra.mxu0 0.0
    %1726 = vmatprep.subr.mxu0 0.0
    %1727 = vmatpush1.msra.mxu0 0.0
    %1728 = vmatprep.subr.mxu0 0.0
    %1729 = vmatpush1.msra.mxu0 0.0
    %1730 = vmatprep.subr.mxu0 0.0
    %1731 = vmatpush1.msra.mxu0 0.0
    %1732 = vmatprep.subr.mxu0 0.0
    %1733 = vmatpush1.msra.mxu0 0.0
    %1734 = vmatprep.subr.mxu0 0.0
    %1735 = vmatpush1.msra.mxu0 0.0
    %1736 = vmatprep.subr.mxu0 0.0
    %1737 = vmatpush1.msra.mxu0 0.0
    %1738 = vmatprep.subr.mxu0 0.0
    %1739 = vmatpush1.msra.mxu0 0.0
    %1740 = vmatprep.subr.mxu0 0.0
    %1741 = vmatpush1.msra.mxu0 0.0
    %1742 = vmatprep.subr.mxu0 0.0
    %1743 = vmatpush1.msra.mxu0 0.0
    %1744 = vmatprep.subr.mxu0 0.0
    %1745 = vmatpush1.msra.mxu0 0.0
    %1746 = vmatprep.mubr.f32.mxu0 0.0
    %1747 = vmatmul.mubr.f32.gmra.mrb[0].mxu0 %v1677
    %v1748 = vpop.f32.mrb[0].mxu0
    %v1749 = vadd.f32 0.0, %v1748
    %v1750 = vpop.f32.mrb[0].mxu0
    %1751 = vmatprep.mubr.f32.mxu0 0.0
    %1752 = vmatmul.mubr.f32.gmra.mrb[0].mxu0 %v1680
    %v1753 = vpop.f32.mrb[0].mxu0
    %v1754 = vadd.f32 0.0, %v1753
    %v1755 = vpop.f32.mrb[0].mxu0
    %1756 = vdwg.mxu0
    %1757 = vrot.lane.b32.xlu0 %v1244, 112
    %v1758 = vpop.permute.xlu0 %1757
    %1759 = vrot.lane.b32.xlu0 %v1249, 112
    %v1760 = vpop.permute.xlu0 %1759
    %1761 = vrot.lane.b32.xlu0 %v1345, 112
    %v1762 = vpop.permute.xlu0 %1761
    %1763 = vrot.lane.b32.xlu0 %v1350, 112
    %v1764 = vpop.permute.xlu0 %1763
    %v1765 = vsel %vm184, %v1758, 0
    %v1767 = vsel %vm184, %v1760, 0
    %v1769 = vsel %vm184, %v1762, 0
    %v1771 = vsel %vm184, %v1764, 0
    %1773 = vmatprep.subr.mxu0 0.0
    %1774 = vmatpush1.xpose.msra.mxu0 %v1769
    %1775 = vmatprep.subr.mxu0 0.0
    %1776 = vmatpush1.xpose.msra.mxu0 %v1771
    %1777 = vmatprep.subr.mxu0 0.0
    %1778 = vmatpush1.xpose.msra.mxu0 0.0
    %1779 = vmatprep.subr.mxu0 0.0
    %1780 = vmatpush1.xpose.msra.mxu0 0.0
    %1781 = vmatprep.subr.mxu0 0.0
    %1782 = vmatpush1.xpose.msra.mxu0 0.0
    %1783 = vmatprep.subr.mxu0 0.0
    %1784 = vmatpush1.xpose.msra.mxu0 0.0
    %1785 = vmatprep.subr.mxu0 0.0
    %1786 = vmatpush1.xpose.msra.mxu0 0.0
    %1787 = vmatprep.subr.mxu0 0.0
    %1788 = vmatpush1.xpose.msra.mxu0 0.0
    %1789 = vmatprep.subr.mxu0 0.0
    %1790 = vmatpush1.xpose.msra.mxu0 0.0
    %1791 = vmatprep.subr.mxu0 0.0
    %1792 = vmatpush1.xpose.msra.mxu0 0.0
    %1793 = vmatprep.subr.mxu0 0.0
    %1794 = vmatpush1.xpose.msra.mxu0 0.0
    %1795 = vmatprep.subr.mxu0 0.0
    %1796 = vmatpush1.xpose.msra.mxu0 0.0
    %1797 = vmatprep.subr.mxu0 0.0
    %1798 = vmatpush1.xpose.msra.mxu0 0.0
    %1799 = vmatprep.subr.mxu0 0.0
    %1800 = vmatpush1.xpose.msra.mxu0 0.0
    %1801 = vmatprep.subr.mxu0 0.0
    %1802 = vmatpush1.xpose.msra.mxu0 0.0
    %1803 = vmatprep.subr.mxu0 0.0
    %1804 = vmatpush1.xpose.msra.mxu0 0.0
    %1805 = vmatprep.subr.mxu0 0.0
    %1806 = vmatpush1.xpose.msra.mxu0 0.0
    %1807 = vmatprep.subr.mxu0 0.0
    %1808 = vmatpush1.xpose.msra.mxu0 0.0
    %1809 = vmatprep.subr.mxu0 0.0
    %1810 = vmatpush1.xpose.msra.mxu0 0.0
    %1811 = vmatprep.subr.mxu0 0.0
    %1812 = vmatpush1.xpose.msra.mxu0 0.0
    %1813 = vmatprep.subr.mxu0 0.0
    %1814 = vmatpush1.xpose.msra.mxu0 0.0
    %1815 = vmatprep.subr.mxu0 0.0
    %1816 = vmatpush1.xpose.msra.mxu0 0.0
    %1817 = vmatprep.subr.mxu0 0.0
    %1818 = vmatpush1.xpose.msra.mxu0 0.0
    %1819 = vmatprep.subr.mxu0 0.0
    %1820 = vmatpush1.xpose.msra.mxu0 0.0
    %1821 = vmatprep.subr.mxu0 0.0
    %1822 = vmatpush1.xpose.msra.mxu0 0.0
    %1823 = vmatprep.subr.mxu0 0.0
    %1824 = vmatpush1.xpose.msra.mxu0 0.0
    %1825 = vmatprep.subr.mxu0 0.0
    %1826 = vmatpush1.xpose.msra.mxu0 0.0
    %1827 = vmatprep.subr.mxu0 0.0
    %1828 = vmatpush1.xpose.msra.mxu0 0.0
    %1829 = vmatprep.subr.mxu0 0.0
    %1830 = vmatpush1.xpose.msra.mxu0 0.0
    %1831 = vmatprep.subr.mxu0 0.0
    %1832 = vmatpush1.xpose.msra.mxu0 0.0
    %1833 = vmatprep.subr.mxu0 0.0
    %1834 = vmatpush1.xpose.msra.mxu0 0.0
    %1835 = vmatprep.subr.mxu0 0.0
    %1836 = vmatpush1.xpose.msra.mxu0 0.0
    %1837 = vmatprep.mubr.f32.mxu0 0.0
    %1838 = vmatmul.mubr.f32.gmra.mrb[0].mxu0 %v1765
    %v1839 = vpop.f32.mrb[0].mxu0
    %v1840 = vadd.f32 0.0, %v1839
    %v1841 = vpop.f32.mrb[0].mxu0
    %1842 = vmatprep.mubr.f32.mxu0 0.0
    %1843 = vmatmul.mubr.f32.gmra.mrb[0].mxu0 %v1767
    %v1844 = vpop.f32.mrb[0].mxu0
    %v1845 = vadd.f32 0.0, %v1844
    %v1846 = vpop.f32.mrb[0].mxu0
    %1847 = vdwg.mxu0
    %v1848 = vmul.f32 %v1840, 0.35355338
    %v1849 = vmul.f32 %v1845, 0.35355338
    %v1850 = vadd.f32 %v1848, %v90
    %v1851 = vadd.f32 %v1849, %v91
    %v1852 = vsel %vm272, %v1850, -inf
    %1853 = vmax.xlane.f32.xlu0 %v1852
    %v1854 = vpop.xlane.xlu0 %1853
    %v1855 = vsel %vm272, %v1851, -inf
    %1856 = vmax.xlane.f32.xlu0 %v1855
    %v1857 = vpop.xlane.xlu0 %1856
    %v1858 = vsub.f32 %v1850, %v1854
    %v1859 = vsub.f32 %v1851, %v1857
    %v1860 = vmul.f32 %v1858, 1.442695
    %v1861 = vpow.pop %v1860
    %v1862 = vmul.f32 %v1859, 1.442695
    %v1863 = vpow.pop %v1862
    %v1864 = vsel %vm272, %v1861, 0.0
    %1865 = vadd.xlane.f32.xlu0 %v1864
    %v1866 = vpop.xlane.xlu0 %1865
    %v1867 = vsel %vm272, %v1863, 0.0
    %1868 = vadd.xlane.f32.xlu0 %v1867
    %v1869 = vpop.xlane.xlu0 %1868
    %v1870 = vrcp.pop %v1866
    %v1871 = vmul.f32 %v1861, %v1870
    %v1872 = vrcp.pop %v1869
    %v1873 = vmul.f32 %v1863, %v1872
    %1874 = vrot.lane.b32.xlu0 %v1345, 80
    %v1875 = vpop.permute.xlu0 %1874
    %1876 = vrot.lane.b32.xlu0 %v1350, 80
    %v1877 = vpop.permute.xlu0 %1876
    %v1881 = vsel %vm272, %v1871, 0
    %v1884 = vsel %vm272, %v1873, 0
    %1886 = vmatprep.subr.mxu0 0.0
    %1887 = vmatpush1.msra.mxu0 %v1875
    %1888 = vmatprep.subr.mxu0 0.0
    %1889 = vmatpush1.msra.mxu0 %v1877
    %1890 = vmatprep.subr.mxu0 0.0
    %1891 = vmatpush1.msra.mxu0 0.0
    %1892 = vmatprep.subr.mxu0 0.0
    %1893 = vmatpush1.msra.mxu0 0.0
    %1894 = vmatprep.subr.mxu0 0.0
    %1895 = vmatpush1.msra.mxu0 0.0
    %1896 = vmatprep.subr.mxu0 0.0
    %1897 = vmatpush1.msra.mxu0 0.0
    %1898 = vmatprep.subr.mxu0 0.0
    %1899 = vmatpush1.msra.mxu0 0.0
    %1900 = vmatprep.subr.mxu0 0.0
    %1901 = vmatpush1.msra.mxu0 0.0
    %1902 = vmatprep.subr.mxu0 0.0
    %1903 = vmatpush1.msra.mxu0 0.0
    %1904 = vmatprep.subr.mxu0 0.0
    %1905 = vmatpush1.msra.mxu0 0.0
    %1906 = vmatprep.subr.mxu0 0.0
    %1907 = vmatpush1.msra.mxu0 0.0
    %1908 = vmatprep.subr.mxu0 0.0
    %1909 = vmatpush1.msra.mxu0 0.0
    %1910 = vmatprep.subr.mxu0 0.0
    %1911 = vmatpush1.msra.mxu0 0.0
    %1912 = vmatprep.subr.mxu0 0.0
    %1913 = vmatpush1.msra.mxu0 0.0
    %1914 = vmatprep.subr.mxu0 0.0
    %1915 = vmatpush1.msra.mxu0 0.0
    %1916 = vmatprep.subr.mxu0 0.0
    %1917 = vmatpush1.msra.mxu0 0.0
    %1918 = vmatprep.subr.mxu0 0.0
    %1919 = vmatpush1.msra.mxu0 0.0
    %1920 = vmatprep.subr.mxu0 0.0
    %1921 = vmatpush1.msra.mxu0 0.0
    %1922 = vmatprep.subr.mxu0 0.0
    %1923 = vmatpush1.msra.mxu0 0.0
    %1924 = vmatprep.subr.mxu0 0.0
    %1925 = vmatpush1.msra.mxu0 0.0
    %1926 = vmatprep.subr.mxu0 0.0
    %1927 = vmatpush1.msra.mxu0 0.0
    %1928 = vmatprep.subr.mxu0 0.0
    %1929 = vmatpush1.msra.mxu0 0.0
    %1930 = vmatprep.subr.mxu0 0.0
    %1931 = vmatpush1.msra.mxu0 0.0
    %1932 = vmatprep.subr.mxu0 0.0
    %1933 = vmatpush1.msra.mxu0 0.0
    %1934 = vmatprep.subr.mxu0 0.0
    %1935 = vmatpush1.msra.mxu0 0.0
    %1936 = vmatprep.subr.mxu0 0.0
    %1937 = vmatpush1.msra.mxu0 0.0
    %1938 = vmatprep.subr.mxu0 0.0
    %1939 = vmatpush1.msra.mxu0 0.0
    %1940 = vmatprep.subr.mxu0 0.0
    %1941 = vmatpush1.msra.mxu0 0.0
    %1942 = vmatprep.subr.mxu0 0.0
    %1943 = vmatpush1.msra.mxu0 0.0
    %1944 = vmatprep.subr.mxu0 0.0
    %1945 = vmatpush1.msra.mxu0 0.0
    %1946 = vmatprep.subr.mxu0 0.0
    %1947 = vmatpush1.msra.mxu0 0.0
    %1948 = vmatprep.subr.mxu0 0.0
    %1949 = vmatpush1.msra.mxu0 0.0
    %1950 = vmatprep.mubr.f32.mxu0 0.0
    %1951 = vmatmul.mubr.f32.gmra.mrb[0].mxu0 %v1881
    %v1952 = vpop.f32.mrb[0].mxu0
    %v1953 = vadd.f32 0.0, %v1952
    %v1954 = vpop.f32.mrb[0].mxu0
    %1955 = vmatprep.mubr.f32.mxu0 0.0
    %1956 = vmatmul.mubr.f32.gmra.mrb[0].mxu0 %v1884
    %v1957 = vpop.f32.mrb[0].mxu0
    %v1958 = vadd.f32 0.0, %v1957
    %v1959 = vpop.f32.mrb[0].mxu0
    %1960 = vdwg.mxu0
    %1961 = vrot.lane.b32.xlu0 %v1244, 104
    %v1962 = vpop.permute.xlu0 %1961
    %1963 = vrot.lane.b32.xlu0 %v1249, 104
    %v1964 = vpop.permute.xlu0 %1963
    %1965 = vrot.lane.b32.xlu0 %v1345, 104
    %v1966 = vpop.permute.xlu0 %1965
    %1967 = vrot.lane.b32.xlu0 %v1350, 104
    %v1968 = vpop.permute.xlu0 %1967
    %v1969 = vsel %vm184, %v1962, 0
    %v1971 = vsel %vm184, %v1964, 0
    %v1973 = vsel %vm184, %v1966, 0
    %v1975 = vsel %vm184, %v1968, 0
    %1977 = vmatprep.subr.mxu0 0.0
    %1978 = vmatpush1.xpose.msra.mxu0 %v1973
    %1979 = vmatprep.subr.mxu0 0.0
    %1980 = vmatpush1.xpose.msra.mxu0 %v1975
    %1981 = vmatprep.subr.mxu0 0.0
    %1982 = vmatpush1.xpose.msra.mxu0 0.0
    %1983 = vmatprep.subr.mxu0 0.0
    %1984 = vmatpush1.xpose.msra.mxu0 0.0
    %1985 = vmatprep.subr.mxu0 0.0
    %1986 = vmatpush1.xpose.msra.mxu0 0.0
    %1987 = vmatprep.subr.mxu0 0.0
    %1988 = vmatpush1.xpose.msra.mxu0 0.0
    %1989 = vmatprep.subr.mxu0 0.0
    %1990 = vmatpush1.xpose.msra.mxu0 0.0
    %1991 = vmatprep.subr.mxu0 0.0
    %1992 = vmatpush1.xpose.msra.mxu0 0.0
    %1993 = vmatprep.subr.mxu0 0.0
    %1994 = vmatpush1.xpose.msra.mxu0 0.0
    %1995 = vmatprep.subr.mxu0 0.0
    %1996 = vmatpush1.xpose.msra.mxu0 0.0
    %1997 = vmatprep.subr.mxu0 0.0
    %1998 = vmatpush1.xpose.msra.mxu0 0.0
    %1999 = vmatprep.subr.mxu0 0.0
    %2000 = vmatpush1.xpose.msra.mxu0 0.0
    %2001 = vmatprep.subr.mxu0 0.0
    %2002 = vmatpush1.xpose.msra.mxu0 0.0
    %2003 = vmatprep.subr.mxu0 0.0
    %2004 = vmatpush1.xpose.msra.mxu0 0.0
    %2005 = vmatprep.subr.mxu0 0.0
    %2006 = vmatpush1.xpose.msra.mxu0 0.0
    %2007 = vmatprep.subr.mxu0 0.0
    %2008 = vmatpush1.xpose.msra.mxu0 0.0
    %2009 = vmatprep.subr.mxu0 0.0
    %2010 = vmatpush1.xpose.msra.mxu0 0.0
    %2011 = vmatprep.subr.mxu0 0.0
    %2012 = vmatpush1.xpose.msra.mxu0 0.0
    %2013 = vmatprep.subr.mxu0 0.0
    %2014 = vmatpush1.xpose.msra.mxu0 0.0
    %2015 = vmatprep.subr.mxu0 0.0
    %2016 = vmatpush1.xpose.msra.mxu0 0.0
    %2017 = vmatprep.subr.mxu0 0.0
    %2018 = vmatpush1.xpose.msra.mxu0 0.0
    %2019 = vmatprep.subr.mxu0 0.0
    %2020 = vmatpush1.xpose.msra.mxu0 0.0
    %2021 = vmatprep.subr.mxu0 0.0
    %2022 = vmatpush1.xpose.msra.mxu0 0.0
    %2023 = vmatprep.subr.mxu0 0.0
    %2024 = vmatpush1.xpose.msra.mxu0 0.0
    %2025 = vmatprep.subr.mxu0 0.0
    %2026 = vmatpush1.xpose.msra.mxu0 0.0
    %2027 = vmatprep.subr.mxu0 0.0
    %2028 = vmatpush1.xpose.msra.mxu0 0.0
    %2029 = vmatprep.subr.mxu0 0.0
    %2030 = vmatpush1.xpose.msra.mxu0 0.0
    %2031 = vmatprep.subr.mxu0 0.0
    %2032 = vmatpush1.xpose.msra.mxu0 0.0
    %2033 = vmatprep.subr.mxu0 0.0
    %2034 = vmatpush1.xpose.msra.mxu0 0.0
    %2035 = vmatprep.subr.mxu0 0.0
    %2036 = vmatpush1.xpose.msra.mxu0 0.0
    %2037 = vmatprep.subr.mxu0 0.0
    %2038 = vmatpush1.xpose.msra.mxu0 0.0
    %2039 = vmatprep.subr.mxu0 0.0
    %2040 = vmatpush1.xpose.msra.mxu0 0.0
    %2041 = vmatprep.mubr.f32.mxu0 0.0
    %2042 = vmatmul.mubr.f32.gmra.mrb[0].mxu0 %v1969
    %v2043 = vpop.f32.mrb[0].mxu0
    %v2044 = vadd.f32 0.0, %v2043
    %v2045 = vpop.f32.mrb[0].mxu0
    %2046 = vmatprep.mubr.f32.mxu0 0.0
    %2047 = vmatmul.mubr.f32.gmra.mrb[0].mxu0 %v1971
    %v2048 = vpop.f32.mrb[0].mxu0
    %v2049 = vadd.f32 0.0, %v2048
    %v2050 = vpop.f32.mrb[0].mxu0
    %2051 = vdwg.mxu0
    %v2052 = vmul.f32 %v2044, 0.35355338
    %v2053 = vmul.f32 %v2049, 0.35355338
    %v2054 = vadd.f32 %v2052, %v90
    %v2055 = vadd.f32 %v2053, %v91
    %v2056 = vsel %vm272, %v2054, -inf
    %2057 = vmax.xlane.f32.xlu0 %v2056
    %v2058 = vpop.xlane.xlu0 %2057
    %v2059 = vsel %vm272, %v2055, -inf
    %2060 = vmax.xlane.f32.xlu0 %v2059
    %v2061 = vpop.xlane.xlu0 %2060
    %v2062 = vsub.f32 %v2054, %v2058
    %v2063 = vsub.f32 %v2055, %v2061
    %v2064 = vmul.f32 %v2062, 1.442695
    %v2065 = vpow.pop %v2064
    %v2066 = vmul.f32 %v2063, 1.442695
    %v2067 = vpow.pop %v2066
    %v2068 = vsel %vm272, %v2065, 0.0
    %2069 = vadd.xlane.f32.xlu0 %v2068
    %v2070 = vpop.xlane.xlu0 %2069
    %v2071 = vsel %vm272, %v2067, 0.0
    %2072 = vadd.xlane.f32.xlu0 %v2071
    %v2073 = vpop.xlane.xlu0 %2072
    %v2074 = vrcp.pop %v2070
    %v2075 = vmul.f32 %v2065, %v2074
    %v2076 = vrcp.pop %v2073
    %v2077 = vmul.f32 %v2067, %v2076
    %2078 = vrot.lane.b32.xlu0 %v1345, 72
    %v2079 = vpop.permute.xlu0 %2078
    %2080 = vrot.lane.b32.xlu0 %v1350, 72
    %v2081 = vpop.permute.xlu0 %2080
    %v2085 = vsel %vm272, %v2075, 0
    %v2088 = vsel %vm272, %v2077, 0
    %2090 = vmatprep.subr.mxu0 0.0
    %2091 = vmatpush1.msra.mxu0 %v2079
    %2092 = vmatprep.subr.mxu0 0.0
    %2093 = vmatpush1.msra.mxu0 %v2081
    %2094 = vmatprep.subr.mxu0 0.0
    %2095 = vmatpush1.msra.mxu0 0.0
    %2096 = vmatprep.subr.mxu0 0.0
    %2097 = vmatpush1.msra.mxu0 0.0
    %2098 = vmatprep.subr.mxu0 0.0
    %2099 = vmatpush1.msra.mxu0 0.0
    %2100 = vmatprep.subr.mxu0 0.0
    %2101 = vmatpush1.msra.mxu0 0.0
    %2102 = vmatprep.subr.mxu0 0.0
    %2103 = vmatpush1.msra.mxu0 0.0
    %2104 = vmatprep.subr.mxu0 0.0
    %2105 = vmatpush1.msra.mxu0 0.0
    %2106 = vmatprep.subr.mxu0 0.0
    %2107 = vmatpush1.msra.mxu0 0.0
    %2108 = vmatprep.subr.mxu0 0.0
    %2109 = vmatpush1.msra.mxu0 0.0
    %2110 = vmatprep.subr.mxu0 0.0
    %2111 = vmatpush1.msra.mxu0 0.0
    %2112 = vmatprep.subr.mxu0 0.0
    %2113 = vmatpush1.msra.mxu0 0.0
    %2114 = vmatprep.subr.mxu0 0.0
    %2115 = vmatpush1.msra.mxu0 0.0
    %2116 = vmatprep.subr.mxu0 0.0
    %2117 = vmatpush1.msra.mxu0 0.0
    %2118 = vmatprep.subr.mxu0 0.0
    %2119 = vmatpush1.msra.mxu0 0.0
    %2120 = vmatprep.subr.mxu0 0.0
    %2121 = vmatpush1.msra.mxu0 0.0
    %2122 = vmatprep.subr.mxu0 0.0
    %2123 = vmatpush1.msra.mxu0 0.0
    %2124 = vmatprep.subr.mxu0 0.0
    %2125 = vmatpush1.msra.mxu0 0.0
    %2126 = vmatprep.subr.mxu0 0.0
    %2127 = vmatpush1.msra.mxu0 0.0
    %2128 = vmatprep.subr.mxu0 0.0
    %2129 = vmatpush1.msra.mxu0 0.0
    %2130 = vmatprep.subr.mxu0 0.0
    %2131 = vmatpush1.msra.mxu0 0.0
    %2132 = vmatprep.subr.mxu0 0.0
    %2133 = vmatpush1.msra.mxu0 0.0
    %2134 = vmatprep.subr.mxu0 0.0
    %2135 = vmatpush1.msra.mxu0 0.0
    %2136 = vmatprep.subr.mxu0 0.0
    %2137 = vmatpush1.msra.mxu0 0.0
    %2138 = vmatprep.subr.mxu0 0.0
    %2139 = vmatpush1.msra.mxu0 0.0
    %2140 = vmatprep.subr.mxu0 0.0
    %2141 = vmatpush1.msra.mxu0 0.0
    %2142 = vmatprep.subr.mxu0 0.0
    %2143 = vmatpush1.msra.mxu0 0.0
    %2144 = vmatprep.subr.mxu0 0.0
    %2145 = vmatpush1.msra.mxu0 0.0
    %2146 = vmatprep.subr.mxu0 0.0
    %2147 = vmatpush1.msra.mxu0 0.0
    %2148 = vmatprep.subr.mxu0 0.0
    %2149 = vmatpush1.msra.mxu0 0.0
    %2150 = vmatprep.subr.mxu0 0.0
    %2151 = vmatpush1.msra.mxu0 0.0
    %2152 = vmatprep.subr.mxu0 0.0
    %2153 = vmatpush1.msra.mxu0 0.0
    %2154 = vmatprep.mubr.f32.mxu0 0.0
    %2155 = vmatmul.mubr.f32.gmra.mrb[0].mxu0 %v2085
    %v2156 = vpop.f32.mrb[0].mxu0
    %v2157 = vadd.f32 0.0, %v2156
    %v2158 = vpop.f32.mrb[0].mxu0
    %2159 = vmatprep.mubr.f32.mxu0 0.0
    %2160 = vmatmul.mubr.f32.gmra.mrb[0].mxu0 %v2088
    %v2161 = vpop.f32.mrb[0].mxu0
    %v2162 = vadd.f32 0.0, %v2161
    %v2163 = vpop.f32.mrb[0].mxu0
    %2164 = vdwg.mxu0
    %2167 = vrot.lane.b32.xlu0 %v1749, 8
    %v2168 = vpop.permute.xlu0 %2167
    %2169 = vrot.lane.b32.xlu0 %v1754, 8
    %v2170 = vpop.permute.xlu0 %2169
    %2175 = vrot.lane.b32.xlu0 %v1953, 16
    %v2176 = vpop.permute.xlu0 %2175
    %2177 = vrot.lane.b32.xlu0 %v1958, 16
    %v2178 = vpop.permute.xlu0 %2177
    %2183 = vrot.lane.b32.xlu0 %v2157, 24
    %v2184 = vpop.permute.xlu0 %2183
    %2185 = vrot.lane.b32.xlu0 %v2162, 24
    %v2186 = vpop.permute.xlu0 %2185
    %v2189 = vsel %vm184, %v1545, %v2168
    %v2190 = vsel %vm184, %v1550, %v2170
    %v2191 = vsel %vm272, %v2189, %v2176
    %v2192 = vsel %vm272, %v2190, %v2178
    %v2193 = vsel %vm1022, %v2191, %v2184
    %v2194 = vsel %vm1022, %v2192, %v2186
    %v2195 = vlaneseq
    %v2196 = vshrl.u32 %v2195, 7
    %v2197 = vsub.s32 4, %v2196
    %v2198 = vrot.slane %v45, %v2197
    %2199 = vrot.lane.b32.xlu0 %v26, 32
    %v2200 = vpop.permute.xlu0 %2199
    %2201 = vrot.lane.b32.xlu0 %v29, 32
    %v2202 = vpop.permute.xlu0 %2201
    %2203 = vrot.lane.b32.xlu0 %v32, 32
    %v2204 = vpop.permute.xlu0 %2203
    %2205 = vrot.lane.b32.xlu0 %v35, 32
    %v2206 = vpop.permute.xlu0 %2205
    %v2212 = vsel %vm96, %v2193, 0
    %v2215 = vsel %vm96, %v2194, 0
    %2217 = vmatprep.subr.mxu0 0.0
    %2218 = vmatpush1.msra.mxu0 %v2200
    %2219 = vmatprep.subr.mxu0 0.0
    %2220 = vmatpush1.msra.mxu0 %v2202
    %2221 = vmatprep.subr.mxu0 0.0
    %2222 = vmatpush1.msra.mxu0 %v2204
    %2223 = vmatprep.subr.mxu0 0.0
    %2224 = vmatpush1.msra.mxu0 %v2206
    %2225 = vmatprep.subr.mxu0 0.0
    %2226 = vmatpush1.msra.mxu0 0.0
    %2227 = vmatprep.subr.mxu0 0.0
    %2228 = vmatpush1.msra.mxu0 0.0
    %2229 = vmatprep.subr.mxu0 0.0
    %2230 = vmatpush1.msra.mxu0 0.0
    %2231 = vmatprep.subr.mxu0 0.0
    %2232 = vmatpush1.msra.mxu0 0.0
    %2233 = vmatprep.subr.mxu0 0.0
    %2234 = vmatpush1.msra.mxu0 0.0
    %2235 = vmatprep.subr.mxu0 0.0
    %2236 = vmatpush1.msra.mxu0 0.0
    %2237 = vmatprep.subr.mxu0 0.0
    %2238 = vmatpush1.msra.mxu0 0.0
    %2239 = vmatprep.subr.mxu0 0.0
    %2240 = vmatpush1.msra.mxu0 0.0
    %2241 = vmatprep.subr.mxu0 0.0
    %2242 = vmatpush1.msra.mxu0 0.0
    %2243 = vmatprep.subr.mxu0 0.0
    %2244 = vmatpush1.msra.mxu0 0.0
    %2245 = vmatprep.subr.mxu0 0.0
    %2246 = vmatpush1.msra.mxu0 0.0
    %2247 = vmatprep.subr.mxu0 0.0
    %2248 = vmatpush1.msra.mxu0 0.0
    %2249 = vmatprep.subr.mxu0 0.0
    %2250 = vmatpush1.msra.mxu0 0.0
    %2251 = vmatprep.subr.mxu0 0.0
    %2252 = vmatpush1.msra.mxu0 0.0
    %2253 = vmatprep.subr.mxu0 0.0
    %2254 = vmatpush1.msra.mxu0 0.0
    %2255 = vmatprep.subr.mxu0 0.0
    %2256 = vmatpush1.msra.mxu0 0.0
    %2257 = vmatprep.subr.mxu0 0.0
    %2258 = vmatpush1.msra.mxu0 0.0
    %2259 = vmatprep.subr.mxu0 0.0
    %2260 = vmatpush1.msra.mxu0 0.0
    %2261 = vmatprep.subr.mxu0 0.0
    %2262 = vmatpush1.msra.mxu0 0.0
    %2263 = vmatprep.subr.mxu0 0.0
    %2264 = vmatpush1.msra.mxu0 0.0
    %2265 = vmatprep.subr.mxu0 0.0
    %2266 = vmatpush1.msra.mxu0 0.0
    %2267 = vmatprep.subr.mxu0 0.0
    %2268 = vmatpush1.msra.mxu0 0.0
    %2269 = vmatprep.subr.mxu0 0.0
    %2270 = vmatpush1.msra.mxu0 0.0
    %2271 = vmatprep.subr.mxu0 0.0
    %2272 = vmatpush1.msra.mxu0 0.0
    %2273 = vmatprep.subr.mxu0 0.0
    %2274 = vmatpush1.msra.mxu0 0.0
    %2275 = vmatprep.subr.mxu0 0.0
    %2276 = vmatpush1.msra.mxu0 0.0
    %2277 = vmatprep.subr.mxu0 0.0
    %2278 = vmatpush1.msra.mxu0 0.0
    %2279 = vmatprep.subr.mxu0 0.0
    %2280 = vmatpush1.msra.mxu0 0.0
    %2281 = vmatprep.mubr.f32.mxu0 0.0
    %2282 = vmatmul.mubr.f32.gmra.mrb[0].mxu0 %v2212
    %v2283 = vpop.f32.mrb[0].mxu0
    %v2284 = vadd.f32 %v2198, %v2283
    %v2285 = vpop.f32.mrb[0].mxu0
    %2286 = vmatprep.mubr.f32.mxu0 0.0
    %2287 = vmatmul.mubr.f32.gmra.mrb[0].mxu0 %v2215
    %v2288 = vpop.f32.mrb[0].mxu0
    %v2289 = vadd.f32 %v2198, %v2288
    %v2290 = vpop.f32.mrb[0].mxu0
    %2291 = vdwg.mxu0
    %v2292 = vadd.f32 %v1165, %v2284
    %v2293 = vadd.f32 %v1166, %v2289
    %v2294 = vsel %vm96, %v2292, 0.0
    %2295 = vadd.xlane.f32.xlu0 %v2294
    %v2296 = vpop.xlane.xlu0 %2295
    %v2297 = vsel %vm96, %v2293, 0.0
    %2298 = vadd.xlane.f32.xlu0 %v2297
    %v2299 = vpop.xlane.xlu0 %2298
    %v2300 = vmul.f32 %v2296, %v1134
    %v2301 = vmul.f32 %v2299, %v1134
    %v2302 = vsub.f32 %v2292, %v2300
    %v2303 = vsub.f32 %v2293, %v2301
    %v2304 = vmul.f32 %v2302, %v2302
    %v2305 = vmul.f32 %v2303, %v2303
    %v2306 = vsel %vm96, %v2304, 0.0
    %2307 = vadd.xlane.f32.xlu0 %v2306
    %v2308 = vpop.xlane.xlu0 %2307
    %v2309 = vsel %vm96, %v2305, 0.0
    %2310 = vadd.xlane.f32.xlu0 %v2309
    %v2311 = vpop.xlane.xlu0 %2310
    %v2312 = vmul.f32 %v2308, %v1134
    %v2313 = vmul.f32 %v2311, %v1134
    %v2314 = vadd.f32 %v2312, 1e-05
    %v2315 = vadd.f32 %v2313, 1e-05
    %v2316 = vrsqrt.pop %v2314
    %v2317 = vrsqrt.pop %v2315
    %v2318 = vmul.f32 %v2302, %v2316
    %v2319 = vmul.f32 %v2303, %v2317
    %v2320 = vlaneseq
    %v2321 = vshrl.u32 %v2320, 7
    %v2322 = vsub.s32 1, %v2321
    %v2323 = vrot.slane %v46, %v2322
    %v2324 = vmul.f32 %v2318, %v2323
    %v2325 = vmul.f32 %v2319, %v2323
    %v2326 = vlaneseq
    %v2327 = vshrl.u32 %v2326, 7
    %v2328 = vsub.s32 2, %v2327
    %v2329 = vrot.slane %v46, %v2328
    %v2330 = vadd.f32 %v2324, %v2329
    %v2331 = vadd.f32 %v2325, %v2329
    %v2332 = vlaneseq
    %v2333 = vshrl.u32 %v2332, 7
    %v2334 = vsub.s32 5, %v2333
    %v2335 = vrot.slane %v45, %v2334
    %v2337 = vsel %vm96, %v2330, 0
    %v2340 = vsel %vm96, %v2331, 0
    %2342 = vmatprep.subr.mxu0 0.0
    %2343 = vmatpush1.msra.mxu0 %v27
    %2344 = vmatprep.subr.mxu0 0.0
    %2345 = vmatpush1.msra.mxu0 %v30
    %2346 = vmatprep.subr.mxu0 0.0
    %2347 = vmatpush1.msra.mxu0 %v33
    %2348 = vmatprep.subr.mxu0 0.0
    %2349 = vmatpush1.msra.mxu0 %v36
    %2350 = vmatprep.subr.mxu0 0.0
    %2351 = vmatpush1.msra.mxu0 0.0
    %2352 = vmatprep.subr.mxu0 0.0
    %2353 = vmatpush1.msra.mxu0 0.0
    %2354 = vmatprep.subr.mxu0 0.0
    %2355 = vmatpush1.msra.mxu0 0.0
    %2356 = vmatprep.subr.mxu0 0.0
    %2357 = vmatpush1.msra.mxu0 0.0
    %2358 = vmatprep.subr.mxu0 0.0
    %2359 = vmatpush1.msra.mxu0 0.0
    %2360 = vmatprep.subr.mxu0 0.0
    %2361 = vmatpush1.msra.mxu0 0.0
    %2362 = vmatprep.subr.mxu0 0.0
    %2363 = vmatpush1.msra.mxu0 0.0
    %2364 = vmatprep.subr.mxu0 0.0
    %2365 = vmatpush1.msra.mxu0 0.0
    %2366 = vmatprep.subr.mxu0 0.0
    %2367 = vmatpush1.msra.mxu0 0.0
    %2368 = vmatprep.subr.mxu0 0.0
    %2369 = vmatpush1.msra.mxu0 0.0
    %2370 = vmatprep.subr.mxu0 0.0
    %2371 = vmatpush1.msra.mxu0 0.0
    %2372 = vmatprep.subr.mxu0 0.0
    %2373 = vmatpush1.msra.mxu0 0.0
    %2374 = vmatprep.subr.mxu0 0.0
    %2375 = vmatpush1.msra.mxu0 0.0
    %2376 = vmatprep.subr.mxu0 0.0
    %2377 = vmatpush1.msra.mxu0 0.0
    %2378 = vmatprep.subr.mxu0 0.0
    %2379 = vmatpush1.msra.mxu0 0.0
    %2380 = vmatprep.subr.mxu0 0.0
    %2381 = vmatpush1.msra.mxu0 0.0
    %2382 = vmatprep.subr.mxu0 0.0
    %2383 = vmatpush1.msra.mxu0 0.0
    %2384 = vmatprep.subr.mxu0 0.0
    %2385 = vmatpush1.msra.mxu0 0.0
    %2386 = vmatprep.subr.mxu0 0.0
    %2387 = vmatpush1.msra.mxu0 0.0
    %2388 = vmatprep.subr.mxu0 0.0
    %2389 = vmatpush1.msra.mxu0 0.0
    %2390 = vmatprep.subr.mxu0 0.0
    %2391 = vmatpush1.msra.mxu0 0.0
    %2392 = vmatprep.subr.mxu0 0.0
    %2393 = vmatpush1.msra.mxu0 0.0
    %2394 = vmatprep.subr.mxu0 0.0
    %2395 = vmatpush1.msra.mxu0 0.0
    %2396 = vmatprep.subr.mxu0 0.0
    %2397 = vmatpush1.msra.mxu0 0.0
    %2398 = vmatprep.subr.mxu0 0.0
    %2399 = vmatpush1.msra.mxu0 0.0
    %2400 = vmatprep.subr.mxu0 0.0
    %2401 = vmatpush1.msra.mxu0 0.0
    %2402 = vmatprep.subr.mxu0 0.0
    %2403 = vmatpush1.msra.mxu0 0.0
    %2404 = vmatprep.subr.mxu0 0.0
    %2405 = vmatpush1.msra.mxu0 0.0
    %2406 = vmatprep.mubr.f32.mxu0 0.0
    %2407 = vmatmul.mubr.f32.gmra.mrb[0].mxu0 %v2337
    %v2408 = vpop.f32.mrb[0].mxu0
    %v2409 = vadd.f32 %v2335, %v2408
    %v2410 = vpop.f32.mrb[0].mxu0
    %2411 = vmatprep.mubr.f32.mxu0 0.0
    %2412 = vmatmul.mubr.f32.gmra.mrb[0].mxu0 %v2340
    %v2413 = vpop.f32.mrb[0].mxu0
    %v2414 = vadd.f32 %v2335, %v2413
    %v2415 = vpop.f32.mrb[0].mxu0
    %2416 = vdwg.mxu0
    %v2417 = vmax.f32 %v2409, 0.0
    %v2418 = vmax.f32 %v2414, 0.0
    %v2419 = vlaneseq
    %v2420 = vshrl.u32 %v2419, 7
    %v2421 = vsub.s32 6, %v2420
    %v2422 = vrot.slane %v45, %v2421
    %vm2423 = vcmask 523264
    %v2425 = vsel %vm2423, %v2417, 0
    %v2428 = vsel %vm2423, %v2418, 0
    %2430 = vmatprep.subr.mxu0 0.0
    %2431 = vmatpush1.msra.mxu0 %v37
    %2432 = vmatprep.subr.mxu0 0.0
    %2433 = vmatpush1.msra.mxu0 %v38
    %2434 = vmatprep.subr.mxu0 0.0
    %2435 = vmatpush1.msra.mxu0 %v39
    %2436 = vmatprep.subr.mxu0 0.0
    %2437 = vmatpush1.msra.mxu0 %v40
    %2438 = vmatprep.subr.mxu0 0.0
    %2439 = vmatpush1.msra.mxu0 %v41
    %2440 = vmatprep.subr.mxu0 0.0
    %2441 = vmatpush1.msra.mxu0 %v42
    %2442 = vmatprep.subr.mxu0 0.0
    %2443 = vmatpush1.msra.mxu0 %v43
    %2444 = vmatprep.subr.mxu0 0.0
    %2445 = vmatpush1.msra.mxu0 %v44
    %2446 = vmatprep.subr.mxu0 0.0
    %2447 = vmatpush1.msra.mxu0 0.0
    %2448 = vmatprep.subr.mxu0 0.0
    %2449 = vmatpush1.msra.mxu0 0.0
    %2450 = vmatprep.subr.mxu0 0.0
    %2451 = vmatpush1.msra.mxu0 0.0
    %2452 = vmatprep.subr.mxu0 0.0
    %2453 = vmatpush1.msra.mxu0 0.0
    %2454 = vmatprep.subr.mxu0 0.0
    %2455 = vmatpush1.msra.mxu0 0.0
    %2456 = vmatprep.subr.mxu0 0.0
    %2457 = vmatpush1.msra.mxu0 0.0
    %2458 = vmatprep.subr.mxu0 0.0
    %2459 = vmatpush1.msra.mxu0 0.0
    %2460 = vmatprep.subr.mxu0 0.0
    %2461 = vmatpush1.msra.mxu0 0.0
    %2462 = vmatprep.subr.mxu0 0.0
    %2463 = vmatpush1.msra.mxu0 0.0
    %2464 = vmatprep.subr.mxu0 0.0
    %2465 = vmatpush1.msra.mxu0 0.0
    %2466 = vmatprep.subr.mxu0 0.0
    %2467 = vmatpush1.msra.mxu0 0.0
    %2468 = vmatprep.subr.mxu0 0.0
    %2469 = vmatpush1.msra.mxu0 0.0
    %2470 = vmatprep.subr.mxu0 0.0
    %2471 = vmatpush1.msra.mxu0 0.0
    %2472 = vmatprep.subr.mxu0 0.0
    %2473 = vmatpush1.msra.mxu0 0.0
    %2474 = vmatprep.subr.mxu0 0.0
    %2475 = vmatpush1.msra.mxu0 0.0
    %2476 = vmatprep.subr.mxu0 0.0
    %2477 = vmatpush1.msra.mxu0 0.0
    %2478 = vmatprep.subr.mxu0 0.0
    %2479 = vmatpush1.msra.mxu0 0.0
    %2480 = vmatprep.subr.mxu0 0.0
    %2481 = vmatpush1.msra.mxu0 0.0
    %2482 = vmatprep.subr.mxu0 0.0
    %2483 = vmatpush1.msra.mxu0 0.0
    %2484 = vmatprep.subr.mxu0 0.0
    %2485 = vmatpush1.msra.mxu0 0.0
    %2486 = vmatprep.subr.mxu0 0.0
    %2487 = vmatpush1.msra.mxu0 0.0
    %2488 = vmatprep.subr.mxu0 0.0
    %2489 = vmatpush1.msra.mxu0 0.0
    %2490 = vmatprep.subr.mxu0 0.0
    %2491 = vmatpush1.msra.mxu0 0.0
    %2492 = vmatprep.subr.mxu0 0.0
    %2493 = vmatpush1.msra.mxu0 0.0
    %2494 = vmatprep.mubr.f32.mxu0 0.0
    %2495 = vmatmul.mubr.f32.gmra.mrb[0].mxu0 %v2425
    %v2496 = vpop.f32.mrb[0].mxu0
    %v2497 = vadd.f32 %v2422, %v2496
    %v2498 = vpop.f32.mrb[0].mxu0
    %2499 = vmatprep.mubr.f32.mxu0 0.0
    %2500 = vmatmul.mubr.f32.gmra.mrb[0].mxu0 %v2428
    %v2501 = vpop.f32.mrb[0].mxu0
    %v2502 = vadd.f32 %v2422, %v2501
    %v2503 = vpop.f32.mrb[0].mxu0
    %2504 = vdwg.mxu0
    %v2505 = vadd.f32 %v2330, %v2497
    %v2506 = vadd.f32 %v2331, %v2502
    %v2507 = vsel %vm96, %v2505, 0.0
    %2508 = vadd.xlane.f32.xlu0 %v2507
    %v2509 = vpop.xlane.xlu0 %2508
    %v2510 = vsel %vm96, %v2506, 0.0
    %2511 = vadd.xlane.f32.xlu0 %v2510
    %v2512 = vpop.xlane.xlu0 %2511
    %v2513 = vmul.f32 %v2509, %v1134
    %v2514 = vmul.f32 %v2512, %v1134
    %v2515 = vsub.f32 %v2505, %v2513
    %v2516 = vsub.f32 %v2506, %v2514
    %v2517 = vmul.f32 %v2515, %v2515
    %v2518 = vmul.f32 %v2516, %v2516
    %v2519 = vsel %vm96, %v2517, 0.0
    %2520 = vadd.xlane.f32.xlu0 %v2519
    %v2521 = vpop.xlane.xlu0 %2520
    %v2522 = vsel %vm96, %v2518, 0.0
    %2523 = vadd.xlane.f32.xlu0 %v2522
    %v2524 = vpop.xlane.xlu0 %2523
    %v2525 = vmul.f32 %v2521, %v1134
    %v2526 = vmul.f32 %v2524, %v1134
    %v2527 = vadd.f32 %v2525, 1e-05
    %v2528 = vadd.f32 %v2526, 1e-05
    %v2529 = vrsqrt.pop %v2527
    %v2530 = vrsqrt.pop %v2528
    %v2531 = vmul.f32 %v2515, %v2529
    %v2532 = vmul.f32 %v2516, %v2530
    %v2533 = vlaneseq
    %v2534 = vshrl.u32 %v2533, 7
    %v2535 = vsub.s32 3, %v2534
    %v2536 = vrot.slane %v46, %v2535
    %v2537 = vmul.f32 %v2531, %v2536
    %v2538 = vmul.f32 %v2532, %v2536
    %v2539 = vlaneseq
    %v2540 = vshrl.u32 %v2539, 7
    %v2541 = vsub.s32 4, %v2540
    %v2542 = vrot.slane %v46, %v2541
    %v2543 = vadd.f32 %v2537, %v2542
    %v2544 = vadd.f32 %v2538, %v2542
    %2545 = vst.msk [vmem:[#allocation2] sm:$0xff] %vm96, %v2543
    %2546 = vst.msk [vmem:[#allocation2 + $0x8] sm:$0xff] %vm96, %v2544
    // Predicated region
    $region22: #{decoder_layer_forward.1} parent=1 // pred_check
      _
    $region23: #{decoder_layer_forward.1} parent=1 // pred_check_branch
      %2548 = sbr.rel (0) target = $region25
    $region24: #{decoder_layer_forward.1} parent=1 // pred_region
      %s2550 = ssub.s32 256, 256
      %2551 = vsyncadd [#allocation3], %s2550
      %s2552 = sshll.u32 [#allocation2], 4
      %s2553 = int_to_ptr.vmem [resolvable:$true] %s2552
      %2558 = dma.vmem_to_hbm [thread:$0]  %s2553, 256, %s5, [#allocation3], 128, 128, 8
    $region25: #{decoder_layer_forward.1} parent=1 // pred_fallthru
      _
    // Predicated region
    $region26: #{decoder_layer_forward.1} parent=1 // pred_check
      _
    $region27: #{decoder_layer_forward.1} parent=1 // pred_check_branch
      %2560 = sbr.rel (0) target = $region29
    $region28: #{decoder_layer_forward.1} parent=1 // pred_region
      %2561 = dma.done [#allocation3], 256
    $region29: #{decoder_layer_forward.1} parent=1 // pred_fallthru
      _
    %2562 = vsyncpa [#allocation3], 1

</llo_original>
